<compile_context>
chip_gen: v7x
topology: tpu7x:2x2x1
jax: 0.10.0
libtpu: 0.0.40
codegen_flags: <defaults>
</compile_context>

<pallas_src>
import functools

import jax
import jax.numpy as jnp
from jax.experimental import pallas as pl
from jax.experimental.pallas import tpu as pltpu


def _round_up(x, m):
    return ((x + m - 1) // m) * m


def _pad2d(a, shape):
    pads = tuple((0, t - s) for s, t in zip(a.shape, shape))
    if any(p[1] for p in pads):
        return jnp.pad(a, pads)
    return a


def _dino_classifier_kernel(x_ref, wd_ref, bd_ref, w1_ref, b1_ref,
                            w2_ref, b2_ref, seed_ref, o_ref, acc_ref,
                            *, dropout_rate, training):
    """Fused: feature-projection (K-tiled) -> Linear -> ReLU -> Dropout -> Linear."""
    k = pl.program_id(1)

    @pl.when(k == 0)
    def _init():
        acc_ref[...] = jnp.zeros_like(acc_ref)

    # Synthetic DINO backbone stand-in: bf16 x bf16 matmul, f32 accumulation
    # across the K (in_features) grid axis.
    acc_ref[...] += jnp.dot(x_ref[...], wd_ref[...],
                            preferred_element_type=jnp.float32)

    @pl.when(k == pl.num_programs(1) - 1)
    def _finalize():
        # f32 epilogue (bias / ReLU / dropout mask stay in f32: correct on
        # v5e's non-bf16 VPU and free elsewhere).
        feat = acc_ref[...] + bd_ref[...]

        # classifier[0]: Linear(1024, fc_units)   classifier[1]: ReLU
        h = jnp.dot(feat.astype(jnp.bfloat16), w1_ref[...],
                    preferred_element_type=jnp.float32)
        h = jnp.maximum(h + b1_ref[...], 0.0)

        # classifier[2]: Dropout(dropout_rate)  (identity in eval mode, matching
        # PyTorch nn.Dropout under model.eval()).  Integer-threshold compare on
        # raw PRNG bits; the 1/(1-p) scale is folded into w2 by the wrapper.
        if training and dropout_rate > 0.0:
            pltpu.prng_seed(seed_ref[0] + pl.program_id(0))
            bits = pltpu.bitcast(pltpu.prng_random_bits(h.shape), jnp.uint32)
            thresh_val = min(int(round(dropout_rate * 4294967296.0)), 4294967295)
            thresh = jnp.asarray(thresh_val, dtype=jnp.uint32)
            h = jnp.where(bits >= thresh, h, 0.0)

        # classifier[3]: Linear(fc_units, 10)  (lane-padded to 128 columns)
        out = jnp.dot(h.astype(jnp.bfloat16), w2_ref[...],
                      preferred_element_type=jnp.float32)
        out = out + b2_ref[...]
        o_ref[...] = out.astype(o_ref.dtype)


def custom_dino_norm_model(x, params, *, dropout_rate=0.2, training=False,
                           seed=0, tm=128, tk=512):
    """Forward pass of CustomDINONormModel.

    x: (B, C, H, W) float32 (NCHW, PyTorch convention)
    returns: (B, 10) float32 logits
    """
    wd, bd, w1, b1, w2, b2 = params
    B = x.shape[0]
    x_flat = x.reshape(B, -1)
    K = x_flat.shape[1]
    dino_dim = wd.shape[1]
    fc = w1.shape[1]
    nc = w2.shape[1]

    # Lane-dense padding for the narrow head dims.
    FC_PAD = _round_up(fc, 128)
    NC_PAD = _round_up(nc, 128)

    # Batch (sublane) tiling: at least 8 rows per block, at most `tm`.
    tm_eff = _round_up(B, 8) if B <= tm else tm
    M_pad = _round_up(B, tm_eff)

    # Reduction (in_features) tiling: 512-wide K slabs of wd, double-buffered
    # by BlockSpec.  Small enough for v7x's scoped VMEM even at 2x buffering.
    tk_eff = tk if K > tk else _round_up(K, 128)
    K_pad = _round_up(K, tk_eff)

    nm = M_pad // tm_eff
    nk = K_pad // tk_eff

    # bf16 weights / activations (biases + accumulator stay f32).
    x_p = _pad2d(x_flat.astype(jnp.bfloat16), (M_pad, K_pad))
    wd_p = _pad2d(wd.astype(jnp.bfloat16), (K_pad, dino_dim))
    w1_p = _pad2d(w1, (dino_dim, FC_PAD)).astype(jnp.bfloat16)
    w2_eff = w2 * (1.0 / (1.0 - dropout_rate)) \
        if (training and dropout_rate > 0.0) else w2
    w2_p = _pad2d(w2_eff, (FC_PAD, NC_PAD)).astype(jnp.bfloat16)
    bd_p = bd.astype(jnp.float32).reshape(1, dino_dim)
    b1_p = _pad2d(b1.astype(jnp.float32).reshape(1, fc), (1, FC_PAD))
    b2_p = _pad2d(b2.astype(jnp.float32).reshape(1, nc), (1, NC_PAD))
    seed_arr = jnp.asarray([seed], dtype=jnp.int32)

    kernel = functools.partial(_dino_classifier_kernel,
                               dropout_rate=float(dropout_rate),
                               training=bool(training))

    flops = (2 * M_pad * K_pad * dino_dim
             + 2 * M_pad * dino_dim * FC_PAD
             + 2 * M_pad * FC_PAD * NC_PAD)
    bytes_accessed = (x_p.size * 2 + wd_p.size * 2 + w1_p.size * 2
                      + w2_p.size * 2
                      + (bd_p.size + b1_p.size + b2_p.size) * 4
                      + M_pad * NC_PAD * 4)

    out = pl.pallas_call(
        kernel,
        out_shape=jax.ShapeDtypeStruct((M_pad, NC_PAD), jnp.float32),
        grid=(nm, nk),
        in_specs=[
            pl.BlockSpec((tm_eff, tk_eff), lambda i, k: (i, k)),     # x tile
            pl.BlockSpec((tk_eff, dino_dim), lambda i, k: (k, 0)),   # wd K-slab
            pl.BlockSpec((1, dino_dim), lambda i, k: (0, 0)),        # bd
            pl.BlockSpec((dino_dim, FC_PAD), lambda i, k: (0, 0)),   # w1
            pl.BlockSpec((1, FC_PAD), lambda i, k: (0, 0)),          # b1
            pl.BlockSpec((FC_PAD, NC_PAD), lambda i, k: (0, 0)),     # w2
            pl.BlockSpec((1, NC_PAD), lambda i, k: (0, 0)),          # b2
            pl.BlockSpec(memory_space=pltpu.SMEM),                   # dropout seed
        ],
        out_specs=pl.BlockSpec((tm_eff, NC_PAD), lambda i, k: (i, 0)),
        scratch_shapes=[pltpu.VMEM((tm_eff, dino_dim), jnp.float32)],
        compiler_params=pltpu.CompilerParams(
            dimension_semantics=("parallel", "arbitrary"),
            vmem_limit_bytes=32 * 1024 * 1024),
        cost_estimate=pl.CostEstimate(flops=flops, transcendentals=0,
                                      bytes_accessed=bytes_accessed),
    )(x_p, wd_p, bd_p, w1_p, b1_p, w2_p, b2_p, seed_arr)

    return out[:B, :nc]


def init_params(key, in_features, dino_dim=1024, fc_units=32, num_classes=10):
    """Deterministic synthetic parameters (shapes from the module __init__)."""
    k = jax.random.split(key, 6)
    wd = jax.random.normal(k[0], (in_features, dino_dim), jnp.float32) * 0.02
    bd = jax.random.normal(k[1], (1, dino_dim), jnp.float32) * 0.01
    w1 = jax.random.normal(k[2], (dino_dim, fc_units), jnp.float32) * 0.02
    b1 = jax.random.normal(k[3], (1, fc_units), jnp.float32) * 0.01
    w2 = jax.random.normal(k[4], (fc_units, num_classes), jnp.float32) * 0.02
    b2 = jax.random.normal(k[5], (1, num_classes), jnp.float32) * 0.01
    return (wd, bd, w1, b1, w2, b2)


def _reference_forward(x, params):
    """Pure-JAX reference mirroring the kernel's bf16-weight / f32-accum math."""
    wd, bd, w1, b1, w2, b2 = params
    B = x.shape[0]
    xf = x.reshape(B, -1).astype(jnp.bfloat16)
    feat = jnp.dot(xf, wd.astype(jnp.bfloat16),
                   preferred_element_type=jnp.float32) + bd
    h = jnp.dot(feat.astype(jnp.bfloat16), w1.astype(jnp.bfloat16),
                preferred_element_type=jnp.float32) + b1
    h = jnp.maximum(h, 0.0)
    out = jnp.dot(h.astype(jnp.bfloat16), w2.astype(jnp.bfloat16),
                  preferred_element_type=jnp.float32) + b2
    return out


if __name__ == "__main__":
    key = jax.random.PRNGKey(0)
    kx, kp = jax.random.split(key)

    # Small shapes consistent with the module's forward: NCHW image in,
    # 1024-d DINO features internally, 10 class logits out.
    B, C, H, W = 2, 4, 16, 16
    fc_units = 32
    x = jax.random.normal(kx, (B, C, H, W), jnp.float32)

    params = init_params(kp, in_features=C * H * W, dino_dim=1024,
                         fc_units=fc_units, num_classes=10)

    out = custom_dino_norm_model(x, params, dropout_rate=0.2, training=False)
    out = jax.block_until_ready(out)

    ref = _reference_forward(x, params)
    assert out.shape == (B, 10), out.shape
    assert jnp.allclose(out, ref, atol=2e-3, rtol=1e-2), (
        "Pallas output does not match reference")

    print("KERNEL_OK")
</pallas_src>

<mosaic_0001>
module attributes {stable_mosaic.version = 11 : i64} {
  func.func @_dino_classifier_kernel(%arg0: i32, %arg1: i32, %arg2: memref<8x512xbf16, #tpu.memory_space<vmem>>, %arg3: memref<512x1024xbf16, #tpu.memory_space<vmem>>, %arg4: memref<1x1024xf32, #tpu.memory_space<vmem>>, %arg5: memref<1024x128xbf16, #tpu.memory_space<vmem>>, %arg6: memref<1x128xf32, #tpu.memory_space<vmem>>, %arg7: memref<128x128xbf16, #tpu.memory_space<vmem>>, %arg8: memref<1x128xf32, #tpu.memory_space<vmem>>, %arg9: memref<1xi32, #tpu.memory_space<smem>>, %arg10: memref<8x128xf32, #tpu.memory_space<vmem>>, %arg11: memref<8x1024xf32, #tpu.memory_space<vmem>>) attributes {dimension_semantics = [#tpu.dimension_semantics<parallel>, #tpu.dimension_semantics<arbitrary>], iteration_bounds = array<i64: 1, 2>, scalar_prefetch = 0 : i64, scratch_operands = 1 : i64, tpu.core_type = #tpu.core_type<tc>, window_params = [{transform_indices = @transform_0, window_bounds = array<i64: 8, 512>}, {transform_indices = @transform_1, window_bounds = array<i64: 512, 1024>}, {pipeline_mode = #tpu.pipeline_mode<synchronous>, transform_indices = @transform_2, window_bounds = array<i64: 1, 1024>}, {pipeline_mode = #tpu.pipeline_mode<synchronous>, transform_indices = @transform_3, window_bounds = array<i64: 1024, 128>}, {pipeline_mode = #tpu.pipeline_mode<synchronous>, transform_indices = @transform_4, window_bounds = array<i64: 1, 128>}, {pipeline_mode = #tpu.pipeline_mode<synchronous>, transform_indices = @transform_5, window_bounds = array<i64: 128, 128>}, {pipeline_mode = #tpu.pipeline_mode<synchronous>, transform_indices = @transform_6, window_bounds = array<i64: 1, 128>}, {transform_indices = @transform_7, window_bounds = array<i64: 1>}, {transform_indices = @transform_8, window_bounds = array<i64: 8, 128>}]} {
    %c0_i32 = arith.constant 0 : i32
    %0 = arith.cmpi eq, %arg1, %c0_i32 : i32
    %1 = arith.extui %0 : i1 to i32
    %c0_i32_0 = arith.constant 0 : i32
    %2 = arith.cmpi ne, %1, %c0_i32_0 : i32
    scf.if %2 {
      %cst_9 = arith.constant 0.000000e+00 : f32
      %12 = vector.broadcast %cst_9 : f32 to vector<8x1024xf32>
      %c0_10 = arith.constant 0 : index
      %c0_11 = arith.constant 0 : index
      %13 = vector.load %arg11[%c0_10, %c0_11] : memref<8x1024xf32, #tpu.memory_space<vmem>>, vector<8x1024xf32>
      tpu.vector_store %arg11[%c0_10, %c0_11], %12 {strides = array<i32>} : memref<8x1024xf32, #tpu.memory_space<vmem>>, vector<8x1024xf32>,
    } else {
    }
    %c0 = arith.constant 0 : index
    %c0_1 = arith.constant 0 : index
    %3 = vector.load %arg11[%c0, %c0_1] : memref<8x1024xf32, #tpu.memory_space<vmem>>, vector<8x1024xf32>
    %c0_2 = arith.constant 0 : index
    %c0_3 = arith.constant 0 : index
    %4 = vector.load %arg2[%c0_2, %c0_3] : memref<8x512xbf16, #tpu.memory_space<vmem>>, vector<8x512xbf16>
    %c0_4 = arith.constant 0 : index
    %c0_5 = arith.constant 0 : index
    %5 = vector.load %arg3[%c0_4, %c0_5] : memref<512x1024xbf16, #tpu.memory_space<vmem>>, vector<512x1024xbf16>
    %cst = arith.constant dense<0.000000e+00> : vector<8x1024xf32>
    %6 = tpu.matmul %4, %5, %cst {dimension_numbers = #tpu.dot_dimension_numbers<[1], [0], [0], [1], [0, 0, 1, 1], [], []>} : vector<8x512xbf16>, vector<512x1024xbf16>, vector<8x1024xf32> -> vector<8x1024xf32>
    %7 = arith.addf %3, %6 : vector<8x1024xf32>
    %c0_6 = arith.constant 0 : index
    %c0_7 = arith.constant 0 : index
    %8 = vector.load %arg11[%c0_6, %c0_7] : memref<8x1024xf32, #tpu.memory_space<vmem>>, vector<8x1024xf32>
    tpu.vector_store %arg11[%c0_6, %c0_7], %7 {strides = array<i32>} : memref<8x1024xf32, #tpu.memory_space<vmem>>, vector<8x1024xf32>,
    %c1_i32 = arith.constant 1 : i32
    %9 = arith.cmpi eq, %arg1, %c1_i32 : i32
    %10 = arith.extui %9 : i1 to i32
    %c0_i32_8 = arith.constant 0 : i32
    %11 = arith.cmpi ne, %10, %c0_i32_8 : i32
    scf.if %11 {
      %c0_9 = arith.constant 0 : index
      %c0_10 = arith.constant 0 : index
      %12 = vector.load %arg11[%c0_9, %c0_10] : memref<8x1024xf32, #tpu.memory_space<vmem>>, vector<8x1024xf32>
      %c0_11 = arith.constant 0 : index
      %c0_12 = arith.constant 0 : index
      %13 = vector.load %arg4[%c0_11, %c0_12] : memref<1x1024xf32, #tpu.memory_space<vmem>>, vector<1x1024xf32>
      %14 = vector.broadcast %13 : vector<1x1024xf32> to vector<8x1024xf32>
      %15 = arith.addf %12, %14 : vector<8x1024xf32>
      %16 = arith.truncf %15 : vector<8x1024xf32> to vector<8x1024xbf16>
      %c0_13 = arith.constant 0 : index
      %c0_14 = arith.constant 0 : index
      %17 = vector.load %arg5[%c0_13, %c0_14] : memref<1024x128xbf16, #tpu.memory_space<vmem>>, vector<1024x128xbf16>
      %cst_15 = arith.constant dense<0.000000e+00> : vector<8x128xf32>
      %18 = tpu.matmul %16, %17, %cst_15 {dimension_numbers = #tpu.dot_dimension_numbers<[1], [0], [0], [1], [0, 0, 1, 1], [], []>} : vector<8x1024xbf16>, vector<1024x128xbf16>, vector<8x128xf32> -> vector<8x128xf32>
      %c0_16 = arith.constant 0 : index
      %c0_17 = arith.constant 0 : index
      %19 = vector.load %arg6[%c0_16, %c0_17] : memref<1x128xf32, #tpu.memory_space<vmem>>, vector<1x128xf32>
      %20 = vector.broadcast %19 : vector<1x128xf32> to vector<8x128xf32>
      %21 = arith.addf %18, %20 : vector<8x128xf32>
      %cst_18 = arith.constant 0.000000e+00 : f32
      %22 = vector.broadcast %cst_18 : f32 to vector<8x128xf32>
      %23 = arith.maximumf %21, %22 : vector<8x128xf32>
      %24 = arith.truncf %23 : vector<8x128xf32> to vector<8x128xbf16>
      %c0_19 = arith.constant 0 : index
      %c0_20 = arith.constant 0 : index
      %25 = vector.load %arg7[%c0_19, %c0_20] : memref<128x128xbf16, #tpu.memory_space<vmem>>, vector<128x128xbf16>
      %cst_21 = arith.constant dense<0.000000e+00> : vector<8x128xf32>
      %26 = tpu.matmul %24, %25, %cst_21 {dimension_numbers = #tpu.dot_dimension_numbers<[1], [0], [0], [1], [0, 0, 1, 1], [], []>} : vector<8x128xbf16>, vector<128x128xbf16>, vector<8x128xf32> -> vector<8x128xf32>
      %c0_22 = arith.constant 0 : index
      %c0_23 = arith.constant 0 : index
      %27 = vector.load %arg8[%c0_22, %c0_23] : memref<1x128xf32, #tpu.memory_space<vmem>>, vector<1x128xf32>
      %28 = vector.broadcast %27 : vector<1x128xf32> to vector<8x128xf32>
      %29 = arith.addf %26, %28 : vector<8x128xf32>
      %c0_24 = arith.constant 0 : index
      %c0_25 = arith.constant 0 : index
      %30 = vector.load %arg10[%c0_24, %c0_25] : memref<8x128xf32, #tpu.memory_space<vmem>>, vector<8x128xf32>
      tpu.vector_store %arg10[%c0_24, %c0_25], %29 {strides = array<i32>} : memref<8x128xf32, #tpu.memory_space<vmem>>, vector<8x128xf32>,
    } else {
    }
    return
  }
  func.func @transform_0(%arg0: i32, %arg1: i32) -> (i32, i32) {
    %c0_i32 = arith.constant 0 : i32
    return %arg0, %arg1 : i32, i32
  }
  func.func @transform_1(%arg0: i32, %arg1: i32) -> (i32, i32) {
    %c0_i32 = arith.constant 0 : i32
    %c0_i32_0 = arith.constant 0 : i32
    return %arg1, %c0_i32 : i32, i32
  }
  func.func @transform_2(%arg0: i32, %arg1: i32) -> (i32, i32) {
    %c0_i32 = arith.constant 0 : i32
    %c0_i32_0 = arith.constant 0 : i32
    %c0_i32_1 = arith.constant 0 : i32
    return %c0_i32, %c0_i32_0 : i32, i32
  }
  func.func @transform_3(%arg0: i32, %arg1: i32) -> (i32, i32) {
    %c0_i32 = arith.constant 0 : i32
    %c0_i32_0 = arith.constant 0 : i32
    %c0_i32_1 = arith.constant 0 : i32
    return %c0_i32, %c0_i32_0 : i32, i32
  }
  func.func @transform_4(%arg0: i32, %arg1: i32) -> (i32, i32) {
    %c0_i32 = arith.constant 0 : i32
    %c0_i32_0 = arith.constant 0 : i32
    %c0_i32_1 = arith.constant 0 : i32
    return %c0_i32, %c0_i32_0 : i32, i32
  }
  func.func @transform_5(%arg0: i32, %arg1: i32) -> (i32, i32) {
    %c0_i32 = arith.constant 0 : i32
    %c0_i32_0 = arith.constant 0 : i32
    %c0_i32_1 = arith.constant 0 : i32
    return %c0_i32, %c0_i32_0 : i32, i32
  }
  func.func @transform_6(%arg0: i32, %arg1: i32) -> (i32, i32) {
    %c0_i32 = arith.constant 0 : i32
    %c0_i32_0 = arith.constant 0 : i32
    %c0_i32_1 = arith.constant 0 : i32
    return %c0_i32, %c0_i32_0 : i32, i32
  }
  func.func @transform_7(%arg0: i32, %arg1: i32) -> i32 {
    %c0_i32 = arith.constant 0 : i32
    %c0_i32_0 = arith.constant 0 : i32
    return %c0_i32 : i32
  }
  func.func @transform_8(%arg0: i32, %arg1: i32) -> (i32, i32) {
    %c0_i32 = arith.constant 0 : i32
    %c0_i32_0 = arith.constant 0 : i32
    return %arg0, %c0_i32 : i32, i32
  }
}

</mosaic_0001>

<llo_original>
// kernel: tpu_custom_call.1
$region0: #{tpu_custom_call.1}
  #allocation0 [shape = 'u32[]', space=smem, size = 0x4, offset = 0x4, fixed_abs, tag = 'smem constant byte address 0x4 - core index']
  #allocation1 [shape = 'u32[144,128]{1,0:T(1,128)}', space=vmem, size = 0x12000, scoped, tag = 'internal scratch']
  #allocation2 [shape = 'f32[8,1024]{1,0:T(8,128)}', space=vmem, size = 0x8000, scoped, tag = 'scratch operand']
  #allocation3 [shape = 's32[1]{0:T(128)S(6)}', space=smem, size = 0x200, scoped, tag = 'scoped memory for tpu_custom_call.1']
  %s0 = inlined_call_operand.hbm [shape: bf16[8,1024], index: 0, kind: input, shape index: {}]
  %s1 = inlined_call_operand.hbm [shape: bf16[1024,1024], index: 1, kind: input, shape index: {}]
  %s2 = inlined_call_operand.hbm [shape: f32[1,1024], index: 2, kind: input, shape index: {}]
  %s3 = inlined_call_operand.hbm [shape: bf16[1024,128], index: 3, kind: input, shape index: {}]
  %s4 = inlined_call_operand.hbm [shape: f32[1,128], index: 4, kind: input, shape index: {}]
  %s5 = inlined_call_operand.hbm [shape: bf16[128,128], index: 5, kind: input, shape index: {}]
  %s6 = inlined_call_operand.hbm [shape: f32[1,128], index: 6, kind: input, shape index: {}]
  %s7 = inlined_call_operand.<no memory space> [shape: s32[1], index: 7, kind: input, shape index: {}]
  %s8 = inlined_call_operand.hbm [shape: f32[8,128], index: 8, kind: output, shape index: {}]
  %s9 = sld [smem:[#allocation0]]
  $region101: #{tpu_custom_call.1} parent=0
    _
  %s11 = ssub.s32 1, %s9
  %s12 = scalar_select 0, %s11, %s9
  %13 = sst [smem:[#allocation3]] %s7
  $region1: #{tpu_custom_call.1} parent=0
    #allocation4 [shape = 'u8[16384]{0}', space=vmem, size = 0x4000, scoped, tag = 'input window, operand 0']
    #allocation5 [shape = 's32[2]{0}', space=sflag, size = 0x8, scoped, tag = 'scoped memory for tpu_custom_call.1']
    #allocation6 [shape = 's32[2]{0}', space=sflag, size = 0x8, scoped, tag = 'scoped memory for tpu_custom_call.1']
    #allocation7 [shape = 'u8[2097152]{0}', space=vmem, size = 0x200000, scoped, tag = 'input window, operand 1']
    #allocation8 [shape = 's32[2]{0}', space=sflag, size = 0x8, scoped, tag = 'scoped memory for tpu_custom_call.1']
    #allocation9 [shape = 'u8[4096]{0}', space=vmem, size = 0x1000, scoped, tag = 'input window, operand 2, single buffered']
    #allocation10 [shape = 'u8[262144]{0}', space=vmem, size = 0x40000, scoped, tag = 'input window, operand 3, single buffered']
    #allocation11 [shape = 's32[1]{0}', space=sflag, size = 0x4, scoped, tag = 'scoped memory for tpu_custom_call.1']
    #allocation12 [shape = 'u8[512]{0}', space=vmem, size = 0x400, scoped, tag = 'input window, operand 4, single buffered']
    #allocation13 [shape = 'u8[32768]{0}', space=vmem, size = 0x8000, scoped, tag = 'input window, operand 5, single buffered']
    #allocation14 [shape = 's32[1]{0}', space=sflag, size = 0x4, scoped, tag = 'scoped memory for tpu_custom_call.1']
    #allocation15 [shape = 'u8[512]{0}', space=vmem, size = 0x400, scoped, tag = 'input window, operand 6, single buffered']
    #allocation16 [shape = 'u8[4096]{0}', space=vmem, size = 0x1000, scoped, tag = 'output window, operand 0, single buffered']
    %14 = vsyncpa [#allocation5], 0
    %s15 = scalar_lea.sflag [#allocation5], 1
    %16 = vsyncpa %s15, 0
    %17 = vsyncpa [#allocation8], 0
    %s18 = scalar_lea.sflag [#allocation8], 1
    %19 = vsyncpa %s18, 0
    %20 = vsyncpa [#allocation11], 0
    %21 = vsyncpa [#allocation14], 0
    %22 = vsyncpa [#allocation6], 0
    loop: start=0, step=1, limit=4
    $region2: #{tpu_custom_call.1} parent=1 // loop_pre_header
      _
    $region3: #{tpu_custom_call.1} parent=1 // loop_header
      %s24 = sphi 0, %s28
      %p25 = scmp.ge.s32.totalorder %s24, 4
      %s31 = sphi 0, %s43
      %s32 = sphi 0, %s39
      %s33 = sphi 0, %s31
      %s34 = sphi 0, %s32
      %s35 = sphi 0, %s33
      %s36 = sphi 0, %s34
      %s48 = sphi 0, %s50
      %s51 = sphi 0, %s48
      %s52 = sphi 0, %s51
      %s68 = sphi 0, %s52
      %s74 = sphi 0, %s76
      %s77 = sphi 0, %s74
      %s78 = sphi 0, %s77
      %s94 = sphi 0, %s78
      %s98 = sphi 0, %s98
      %s100 = sphi 0, %s98
      %s101 = sphi 0, %s100
      %s115 = sphi 0, %s101
      %s119 = sphi 0, %s119
      %s121 = sphi 0, %s119
      %s122 = sphi 0, %s121
      %s136 = sphi 0, %s122
      %s140 = sphi 0, %s140
      %s142 = sphi 0, %s140
      %s143 = sphi 0, %s142
      %s157 = sphi 0, %s143
      %s161 = sphi 0, %s161
      %s163 = sphi 0, %s161
      %s164 = sphi 0, %s163
      %s178 = sphi 0, %s164
      %s182 = sphi 0, %s182
      %s184 = sphi 0, %s182
      %s185 = sphi 0, %s184
      %s199 = sphi 0, %s185
      %s203 = sphi 0, %s203
      %s205 = sphi 0, %s203
      %s206 = sphi 0, %s205
      %s220 = sphi 0, %s206
      %s226 = sphi 0, %s228
      %s229 = sphi 0, %s226
      %s230 = sphi 0, %s229
      %s246 = sphi 0, %s230
    $region4: #{tpu_custom_call.1} parent=1 // loop_header_branch
      %27 = sbr.rel (%p25) target = $region8
    $region5: #{tpu_custom_call.1} parent=1 // loop_body
      %s29 = ssub.s32 %s24, 1
      %s30 = ssub.s32 %s24, 2
      %s37 = sadd.s32 1, %s32
      %p38 = scmp.ge.s32.totalorder %s37, 2
      %s39 = scalar_select %p38, 0, %s37
      %s40 = sadd.s32 1, %s31
      %s41 = scalar_select %p38, %s40, %s31
      %p42 = scmp.ge.s32.totalorder %s41, 1
      %s43 = scalar_select %p42, 0, %s41
      %s44 = ssub.s32 %s31, %s43
      %s45 = ssub.s32 %s32, %s39
      %s46 = sor.u32 %s44, %s45
      %p47 = scmp.eq.s32.totalorder %s46, 0
      %s49 = sadd.s32 %s48, 1
      %s50 = scalar_select %p47, %s48, %s49
      %p53 = pneg %p47
      %p54 = scmp.eq.s32.totalorder %s24, 1
      %p55 = por %p53, %p54
      %p56 = scmp.ne.s32.totalorder %s48, %s51
      %p57 = scmp.eq.s32.totalorder %s24, 0
      %p58 = por %p56, %p57
      %p59 = scmp.ne.s32.totalorder %s48, %s51
      %p60 = scmp.eq.s32.totalorder %s29, 1
      %p61 = por %p59, %p60
      %p62 = scmp.ne.s32.totalorder %s51, %s52
      %p63 = scmp.eq.s32.totalorder %s29, 0
      %p64 = por %p62, %p63
      %p65 = scmp.ne.s32.totalorder %s51, %s52
      %p66 = scmp.eq.s32.totalorder %s30, 1
      %p67 = por %p65, %p66
      %p69 = scmp.ne.s32.totalorder %s52, %s68
      %p70 = scmp.eq.s32.totalorder %s30, 0
      %p71 = por %p69, %p70
      %s72 = ssub.s32 %s32, %s39
      %p73 = scmp.eq.s32.totalorder %s72, 0
      %s75 = sadd.s32 %s74, 1
      %s76 = scalar_select %p73, %s74, %s75
      %p79 = pneg %p73
      %p80 = scmp.eq.s32.totalorder %s24, 1
      %p81 = por %p79, %p80
      %p82 = scmp.ne.s32.totalorder %s74, %s77
      %p83 = scmp.eq.s32.totalorder %s24, 0
      %p84 = por %p82, %p83
      %p85 = scmp.ne.s32.totalorder %s74, %s77
      %p86 = scmp.eq.s32.totalorder %s29, 1
      %p87 = por %p85, %p86
      %p88 = scmp.ne.s32.totalorder %s77, %s78
      %p89 = scmp.eq.s32.totalorder %s29, 0
      %p90 = por %p88, %p89
      %p91 = scmp.ne.s32.totalorder %s77, %s78
      %p92 = scmp.eq.s32.totalorder %s30, 1
      %p93 = por %p91, %p92
      %p95 = scmp.ne.s32.totalorder %s78, %s94
      %p96 = scmp.eq.s32.totalorder %s30, 0
      %p97 = por %p95, %p96
      %s99 = sadd.s32 %s98, 1
      %p102 = scmp.eq.s32.totalorder %s24, 1
      %p103 = scmp.ne.s32.totalorder %s98, %s100
      %p104 = scmp.eq.s32.totalorder %s24, 0
      %p105 = por %p103, %p104
      %p106 = scmp.ne.s32.totalorder %s98, %s100
      %p107 = scmp.eq.s32.totalorder %s29, 1
      %p108 = por %p106, %p107
      %p109 = scmp.ne.s32.totalorder %s100, %s101
      %p110 = scmp.eq.s32.totalorder %s29, 0
      %p111 = por %p109, %p110
      %p112 = scmp.ne.s32.totalorder %s100, %s101
      %p113 = scmp.eq.s32.totalorder %s30, 1
      %p114 = por %p112, %p113
      %p116 = scmp.ne.s32.totalorder %s101, %s115
      %p117 = scmp.eq.s32.totalorder %s30, 0
      %p118 = por %p116, %p117
      %s120 = sadd.s32 %s119, 1
      %p123 = scmp.eq.s32.totalorder %s24, 1
      %p124 = scmp.ne.s32.totalorder %s119, %s121
      %p125 = scmp.eq.s32.totalorder %s24, 0
      %p126 = por %p124, %p125
      %p127 = scmp.ne.s32.totalorder %s119, %s121
      %p128 = scmp.eq.s32.totalorder %s29, 1
      %p129 = por %p127, %p128
      %p130 = scmp.ne.s32.totalorder %s121, %s122
      %p131 = scmp.eq.s32.totalorder %s29, 0
      %p132 = por %p130, %p131
      %p133 = scmp.ne.s32.totalorder %s121, %s122
      %p134 = scmp.eq.s32.totalorder %s30, 1
      %p135 = por %p133, %p134
      %p137 = scmp.ne.s32.totalorder %s122, %s136
      %p138 = scmp.eq.s32.totalorder %s30, 0
      %p139 = por %p137, %p138
      %s141 = sadd.s32 %s140, 1
      %p144 = scmp.eq.s32.totalorder %s24, 1
      %p145 = scmp.ne.s32.totalorder %s140, %s142
      %p146 = scmp.eq.s32.totalorder %s24, 0
      %p147 = por %p145, %p146
      %p148 = scmp.ne.s32.totalorder %s140, %s142
      %p149 = scmp.eq.s32.totalorder %s29, 1
      %p150 = por %p148, %p149
      %p151 = scmp.ne.s32.totalorder %s142, %s143
      %p152 = scmp.eq.s32.totalorder %s29, 0
      %p153 = por %p151, %p152
      %p154 = scmp.ne.s32.totalorder %s142, %s143
      %p155 = scmp.eq.s32.totalorder %s30, 1
      %p156 = por %p154, %p155
      %p158 = scmp.ne.s32.totalorder %s143, %s157
      %p159 = scmp.eq.s32.totalorder %s30, 0
      %p160 = por %p158, %p159
      %s162 = sadd.s32 %s161, 1
      %p165 = scmp.eq.s32.totalorder %s24, 1
      %p166 = scmp.ne.s32.totalorder %s161, %s163
      %p167 = scmp.eq.s32.totalorder %s24, 0
      %p168 = por %p166, %p167
      %p169 = scmp.ne.s32.totalorder %s161, %s163
      %p170 = scmp.eq.s32.totalorder %s29, 1
      %p171 = por %p169, %p170
      %p172 = scmp.ne.s32.totalorder %s163, %s164
      %p173 = scmp.eq.s32.totalorder %s29, 0
      %p174 = por %p172, %p173
      %p175 = scmp.ne.s32.totalorder %s163, %s164
      %p176 = scmp.eq.s32.totalorder %s30, 1
      %p177 = por %p175, %p176
      %p179 = scmp.ne.s32.totalorder %s164, %s178
      %p180 = scmp.eq.s32.totalorder %s30, 0
      %p181 = por %p179, %p180
      %s183 = sadd.s32 %s182, 1
      %p186 = scmp.eq.s32.totalorder %s24, 1
      %p187 = scmp.ne.s32.totalorder %s182, %s184
      %p188 = scmp.eq.s32.totalorder %s24, 0
      %p189 = por %p187, %p188
      %p190 = scmp.ne.s32.totalorder %s182, %s184
      %p191 = scmp.eq.s32.totalorder %s29, 1
      %p192 = por %p190, %p191
      %p193 = scmp.ne.s32.totalorder %s184, %s185
      %p194 = scmp.eq.s32.totalorder %s29, 0
      %p195 = por %p193, %p194
      %p196 = scmp.ne.s32.totalorder %s184, %s185
      %p197 = scmp.eq.s32.totalorder %s30, 1
      %p198 = por %p196, %p197
      %p200 = scmp.ne.s32.totalorder %s185, %s199
      %p201 = scmp.eq.s32.totalorder %s30, 0
      %p202 = por %p200, %p201
      %s204 = sadd.s32 %s203, 1
      %p207 = scmp.eq.s32.totalorder %s24, 1
      %p208 = scmp.ne.s32.totalorder %s203, %s205
      %p209 = scmp.eq.s32.totalorder %s24, 0
      %p210 = por %p208, %p209
      %p211 = scmp.ne.s32.totalorder %s203, %s205
      %p212 = scmp.eq.s32.totalorder %s29, 1
      %p213 = por %p211, %p212
      %p214 = scmp.ne.s32.totalorder %s205, %s206
      %p215 = scmp.eq.s32.totalorder %s29, 0
      %p216 = por %p214, %p215
      %p217 = scmp.ne.s32.totalorder %s205, %s206
      %p218 = scmp.eq.s32.totalorder %s30, 1
      %p219 = por %p217, %p218
      %p221 = scmp.ne.s32.totalorder %s206, %s220
      %p222 = scmp.eq.s32.totalorder %s30, 0
      %p223 = por %p221, %p222
      %s224 = ssub.s32 %s31, %s43
      %p225 = scmp.eq.s32.totalorder %s224, 0
      %s227 = sadd.s32 %s226, 1
      %s228 = scalar_select %p225, %s226, %s227
      %p231 = pneg %p225
      %p232 = scmp.eq.s32.totalorder %s24, 1
      %p233 = por %p231, %p232
      %p234 = scmp.ne.s32.totalorder %s226, %s229
      %p235 = scmp.eq.s32.totalorder %s24, 0
      %p236 = por %p234, %p235
      %p237 = scmp.ne.s32.totalorder %s226, %s229
      %p238 = scmp.eq.s32.totalorder %s29, 1
      %p239 = por %p237, %p238
      %p240 = scmp.ne.s32.totalorder %s229, %s230
      %p241 = scmp.eq.s32.totalorder %s29, 0
      %p242 = por %p240, %p241
      %p243 = scmp.ne.s32.totalorder %s229, %s230
      %p244 = scmp.eq.s32.totalorder %s30, 1
      %p245 = por %p243, %p244
      %p247 = scmp.ne.s32.totalorder %s230, %s246
      %p248 = scmp.eq.s32.totalorder %s30, 0
      %p249 = por %p247, %p248
      %p250 = scmp.le.s32.totalorder 1, %s24
      %p251 = scmp.lt.s32.totalorder %s24, 3
      %p252 = pnand %p250, %p251
      %p253 = pneg %p252
      // Predicated region
      $region9: #{tpu_custom_call.1} parent=5 // pred_check
        _
      $region10: #{tpu_custom_call.1} parent=5 // pred_check_branch
        %255 = sbr.rel (%p252) target = $region12
      $region11: #{tpu_custom_call.1} parent=5 // pred_region
        %s256 = ssub.s32 %s24, 1
        // Predicated region
        $region13: #{tpu_custom_call.1} parent=11 // pred_check
          %p257 = pneg %p111
        $region14: #{tpu_custom_call.1} parent=11 // pred_check_branch
          %259 = sbr.rel (%p257) target = $region16
        $region15: #{tpu_custom_call.1} parent=11 // pred_region
          %s261 = ssub.s32 128, 128
          %262 = vsyncadd [#allocation8], %s261
          %s264 = sshll.u32 [#allocation9], 4
          %s265 = int_to_ptr.vmem [resolvable:$true] %s264
          %267 = dma.hbm_to_vmem [thread:$0]  %s2, 128, %s265, [#allocation8]
        $region16: #{tpu_custom_call.1} parent=11 // pred_fallthru
          _
        // Predicated region
        $region17: #{tpu_custom_call.1} parent=11 // pred_check
          %p268 = pneg %p132
        $region18: #{tpu_custom_call.1} parent=11 // pred_check_branch
          %270 = sbr.rel (%p268) target = $region20
        $region19: #{tpu_custom_call.1} parent=11 // pred_region
          %s272 = ssub.s32 8192, 8192
          %273 = vsyncadd [#allocation11], %s272
          %s274 = sshll.u32 [#allocation10], 4
          %s275 = int_to_ptr.vmem [resolvable:$true] %s274
          %280 = dma.hbm_to_vmem [thread:$0]  %s3, 8192, %s275, [#allocation11], 64, 64, 4
        $region20: #{tpu_custom_call.1} parent=11 // pred_fallthru
          _
        // Predicated region
        $region21: #{tpu_custom_call.1} parent=11 // pred_check
          %p281 = pneg %p153
        $region22: #{tpu_custom_call.1} parent=11 // pred_check_branch
          %283 = sbr.rel (%p281) target = $region24
        $region23: #{tpu_custom_call.1} parent=11 // pred_region
          %s285 = ssub.s32 16, 16
          %286 = vsyncadd [#allocation11], %s285
          %s288 = sshll.u32 [#allocation12], 4
          %s289 = int_to_ptr.vmem [resolvable:$true] %s288
          %291 = dma.hbm_to_vmem [thread:$0]  %s4, 16, %s289, [#allocation11]
        $region24: #{tpu_custom_call.1} parent=11 // pred_fallthru
          _
        // Predicated region
        $region25: #{tpu_custom_call.1} parent=11 // pred_check
          %p292 = pneg %p174
        $region26: #{tpu_custom_call.1} parent=11 // pred_check_branch
          %294 = sbr.rel (%p292) target = $region28
        $region27: #{tpu_custom_call.1} parent=11 // pred_region
          %s296 = ssub.s32 1024, 1024
          %297 = vsyncadd [#allocation14], %s296
          %s298 = sshll.u32 [#allocation13], 4
          %s299 = int_to_ptr.vmem [resolvable:$true] %s298
          %304 = dma.hbm_to_vmem [thread:$0]  %s5, 1024, %s299, [#allocation14], 64, 64, 4
        $region28: #{tpu_custom_call.1} parent=11 // pred_fallthru
          _
        // Predicated region
        $region29: #{tpu_custom_call.1} parent=11 // pred_check
          %p305 = pneg %p195
        $region30: #{tpu_custom_call.1} parent=11 // pred_check_branch
          %307 = sbr.rel (%p305) target = $region32
        $region31: #{tpu_custom_call.1} parent=11 // pred_region
          %s309 = ssub.s32 16, 16
          %310 = vsyncadd [#allocation14], %s309
          %s312 = sshll.u32 [#allocation15], 4
          %s313 = int_to_ptr.vmem [resolvable:$true] %s312
          %315 = dma.hbm_to_vmem [thread:$0]  %s6, 16, %s313, [#allocation14]
        $region32: #{tpu_custom_call.1} parent=11 // pred_fallthru
          _
        // Predicated region
        $region33: #{tpu_custom_call.1} parent=11 // pred_check
          %p316 = pneg %p216
        $region34: #{tpu_custom_call.1} parent=11 // pred_check_branch
          %318 = sbr.rel (%p316) target = $region36
        $region35: #{tpu_custom_call.1} parent=11 // pred_region
          _
        $region36: #{tpu_custom_call.1} parent=11 // pred_fallthru
          _
      $region12: #{tpu_custom_call.1} parent=5 // pred_fallthru
        _
      %p319 = scmp.lt.s32.totalorder %s24, 2
      // Predicated region
      $region37: #{tpu_custom_call.1} parent=5 // pred_check
        %p320 = pneg %p319
      $region38: #{tpu_custom_call.1} parent=5 // pred_check_branch
        %322 = sbr.rel (%p320) target = $region40
      $region39: #{tpu_custom_call.1} parent=5 // pred_region
        // Predicated region
        $region41: #{tpu_custom_call.1} parent=39 // pred_check
          %p323 = pneg %p58
        $region42: #{tpu_custom_call.1} parent=39 // pred_check_branch
          %325 = sbr.rel (%p323) target = $region44
        $region43: #{tpu_custom_call.1} parent=39 // pred_region
          %s326 = sand.u32 %s48, 1
          %s327 = scalar_lea.sflag [#allocation5], %s326
          %s328 = sand.u32 %s48, 1
          %s329 = smul.addr %s328, 16
          %s330 = scalar_lea.vmem [#allocation4], %s329
          %s331 = smul.u32 4, %s32
          %s333 = ssub.s32 256, 256
          %334 = vsyncadd %s327, %s333
          %s335 = smul.addr %s31, 8
          %s336 = sadd.s32 %s331, %s335
          %s337 = smul.addr %s336, 64
          %s338 = scalar_lea.hbm %s0, %s337
          %s340 = sshll.u32 %s330, 4
          %s341 = int_to_ptr.vmem [resolvable:$true] %s340
          %343 = dma.hbm_to_vmem [thread:$0]  %s338, 256, %s341, %s327
        $region44: #{tpu_custom_call.1} parent=39 // pred_fallthru
          _
        // Predicated region
        $region45: #{tpu_custom_call.1} parent=39 // pred_check
          %p344 = pneg %p84
        $region46: #{tpu_custom_call.1} parent=39 // pred_check_branch
          %346 = sbr.rel (%p344) target = $region48
        $region47: #{tpu_custom_call.1} parent=39 // pred_region
          %s347 = sand.u32 %s24, 1
          %s348 = scalar_lea.sflag [#allocation8], %s347
          %s349 = sand.u32 %s74, 1
          %s350 = smul.addr %s349, 2048
          %s351 = scalar_lea.vmem [#allocation7], %s350
          %s352 = smul.u32 64, %s32
          %s354 = ssub.s32 32768, 32768
          %355 = vsyncadd %s348, %s354
          %s356 = smul.addr %s352, 8
          %s357 = smul.addr %s356, 64
          %s358 = scalar_lea.hbm %s1, %s357
          %s359 = sshll.u32 %s351, 4
          %s360 = int_to_ptr.vmem [resolvable:$true] %s359
          %365 = dma.hbm_to_vmem [thread:$0]  %s358, 32768, %s360, %s348, 512, 512, 32
        $region48: #{tpu_custom_call.1} parent=39 // pred_fallthru
          _
      $region40: #{tpu_custom_call.1} parent=5 // pred_fallthru
        _
      %p366 = scmp.le.s32.totalorder 1, %s24
      %p367 = scmp.lt.s32.totalorder %s24, 3
      %p368 = pnand %p366, %p367
      %p369 = pneg %p368
      // Predicated region
      $region49: #{tpu_custom_call.1} parent=5 // pred_check
        _
      $region50: #{tpu_custom_call.1} parent=5 // pred_check_branch
        %371 = sbr.rel (%p368) target = $region52
      $region51: #{tpu_custom_call.1} parent=5 // pred_region
        %s372 = ssub.s32 %s24, 1
        %s373 = sand.u32 %s51, 1
        %s374 = scalar_lea.sflag [#allocation5], %s373
        %s375 = sand.u32 %s51, 1
        %s376 = smul.addr %s375, 16
        %s377 = scalar_lea.vmem [#allocation4], %s376
        // Predicated region
        $region53: #{tpu_custom_call.1} parent=51 // pred_check
          %p378 = pneg %p64
        $region54: #{tpu_custom_call.1} parent=51 // pred_check_branch
          %380 = sbr.rel (%p378) target = $region56
        $region55: #{tpu_custom_call.1} parent=51 // pred_region
          %381 = dma.done %s374, 256
        $region56: #{tpu_custom_call.1} parent=51 // pred_fallthru
          _
        %s382 = sand.u32 %s29, 1
        %s383 = scalar_lea.sflag [#allocation8], %s382
        %s384 = sand.u32 %s77, 1
        %s385 = smul.addr %s384, 2048
        %s386 = scalar_lea.vmem [#allocation7], %s385
        // Predicated region
        $region57: #{tpu_custom_call.1} parent=51 // pred_check
          %p387 = pneg %p90
        $region58: #{tpu_custom_call.1} parent=51 // pred_check_branch
          %389 = sbr.rel (%p387) target = $region60
        $region59: #{tpu_custom_call.1} parent=51 // pred_region
          %390 = dma.done %s383, 32768
        $region60: #{tpu_custom_call.1} parent=51 // pred_fallthru
          _
        // Predicated region
        $region61: #{tpu_custom_call.1} parent=51 // pred_check
          %p391 = pneg %p111
        $region62: #{tpu_custom_call.1} parent=51 // pred_check_branch
          %393 = sbr.rel (%p391) target = $region64
        $region63: #{tpu_custom_call.1} parent=51 // pred_region
          %394 = dma.done [#allocation8], 128
        $region64: #{tpu_custom_call.1} parent=51 // pred_fallthru
          _
        // Predicated region
        $region65: #{tpu_custom_call.1} parent=51 // pred_check
          %p395 = pneg %p132
        $region66: #{tpu_custom_call.1} parent=51 // pred_check_branch
          %397 = sbr.rel (%p395) target = $region68
        $region67: #{tpu_custom_call.1} parent=51 // pred_region
          %398 = dma.done [#allocation11], 8192
        $region68: #{tpu_custom_call.1} parent=51 // pred_fallthru
          _
        // Predicated region
        $region69: #{tpu_custom_call.1} parent=51 // pred_check
          %p399 = pneg %p153
        $region70: #{tpu_custom_call.1} parent=51 // pred_check_branch
          %401 = sbr.rel (%p399) target = $region72
        $region71: #{tpu_custom_call.1} parent=51 // pred_region
          %402 = dma.done [#allocation11], 16
        $region72: #{tpu_custom_call.1} parent=51 // pred_fallthru
          _
        // Predicated region
        $region73: #{tpu_custom_call.1} parent=51 // pred_check
          %p403 = pneg %p174
        $region74: #{tpu_custom_call.1} parent=51 // pred_check_branch
          %405 = sbr.rel (%p403) target = $region76
        $region75: #{tpu_custom_call.1} parent=51 // pred_region
          %406 = dma.done [#allocation14], 1024
        $region76: #{tpu_custom_call.1} parent=51 // pred_fallthru
          _
        // Predicated region
        $region77: #{tpu_custom_call.1} parent=51 // pred_check
          %p407 = pneg %p195
        $region78: #{tpu_custom_call.1} parent=51 // pred_check_branch
          %409 = sbr.rel (%p407) target = $region80
        $region79: #{tpu_custom_call.1} parent=51 // pred_region
          %410 = dma.done [#allocation14], 16
        $region80: #{tpu_custom_call.1} parent=51 // pred_fallthru
          _
        %s411 = sand.u32 %s51, 1
        %s412 = scalar_lea.sflag [#allocation5], %s411
        %s413 = sand.u32 %s51, 1
        %s414 = smul.addr %s413, 16
        %s415 = scalar_lea.vmem [#allocation4], %s414
        %p416 = pneg %p64
        %p417 = pneg %p61
        %s418 = sand.u32 %s29, 1
        %s419 = scalar_lea.sflag [#allocation8], %s418
        %s420 = sand.u32 %s77, 1
        %s421 = smul.addr %s420, 2048
        %s422 = scalar_lea.vmem [#allocation7], %s421
        %p423 = pneg %p90
        %p424 = pneg %p87
        %p425 = pneg %p111
        %p426 = pneg %p108
        %p427 = pneg %p132
        %p428 = pneg %p129
        %p429 = pneg %p153
        %p430 = pneg %p150
        %p431 = pneg %p174
        %p432 = pneg %p171
        %p433 = pneg %p195
        %p434 = pneg %p192
        %p435 = pneg %p216
        %p436 = pneg %p213
        %p437 = pneg %p242
        %p438 = pneg %p239
        %s439 = smul.u32 4, %s34
        %s440 = smul.u32 64, %s34
        %p442 = scmp.eq.s32.totalorder %s34, 0
        // Predicated region
        $region81: #{tpu_custom_call.1} parent=51 // pred_check
          %p443 = pneg %p442
        $region82: #{tpu_custom_call.1} parent=51 // pred_check_branch
          %445 = sbr.rel (%p443) target = $region84
        $region83: #{tpu_custom_call.1} parent=51 // pred_region
          %446 = vst [vmem:[#allocation2] sm:$0xff] 0.0
          %447 = vst [vmem:[#allocation2 + $0x8] sm:$0xff] 0.0
          %448 = vst [vmem:[#allocation2 + $0x10] sm:$0xff] 0.0
          %449 = vst [vmem:[#allocation2 + $0x18] sm:$0xff] 0.0
          %450 = vst [vmem:[#allocation2 + $0x20] sm:$0xff] 0.0
          %451 = vst [vmem:[#allocation2 + $0x28] sm:$0xff] 0.0
          %452 = vst [vmem:[#allocation2 + $0x30] sm:$0xff] 0.0
          %453 = vst [vmem:[#allocation2 + $0x38] sm:$0xff] 0.0
        $region84: #{tpu_custom_call.1} parent=51 // pred_fallthru
          _
        %v454 = vld [vmem:[#allocation2] sm:$0xff]
        %v455 = vld [vmem:[#allocation2 + $0x8] sm:$0xff]
        %v456 = vld [vmem:[#allocation2 + $0x10] sm:$0xff]
        %v457 = vld [vmem:[#allocation2 + $0x18] sm:$0xff]
        %v458 = vld [vmem:[#allocation2 + $0x20] sm:$0xff]
        %v459 = vld [vmem:[#allocation2 + $0x28] sm:$0xff]
        %v460 = vld [vmem:[#allocation2 + $0x30] sm:$0xff]
        %v461 = vld [vmem:[#allocation2 + $0x38] sm:$0xff]
        %v462 = vld [vmem:[%s377] sm:$0xff]
        %v463 = vld [vmem:[%s377 + $0x8] sm:$0xff]
        %v464 = vld [vmem:[%s386] sm:$0xff]
        %v465 = vld [vmem:[%s386 + $0x8] sm:$0xff]
        %v466 = vld [vmem:[%s386 + $0x10] sm:$0xff]
        %v467 = vld [vmem:[%s386 + $0x18] sm:$0xff]
        %v468 = vld [vmem:[%s386 + $0x20] sm:$0xff]
        %v469 = vld [vmem:[%s386 + $0x28] sm:$0xff]
        %v470 = vld [vmem:[%s386 + $0x30] sm:$0xff]
        %v471 = vld [vmem:[%s386 + $0x38] sm:$0xff]
        %v472 = vld [vmem:[%s386 + $0x40] sm:$0xff]
        %v473 = vld [vmem:[%s386 + $0x48] sm:$0xff]
        %v474 = vld [vmem:[%s386 + $0x50] sm:$0xff]
        %v475 = vld [vmem:[%s386 + $0x58] sm:$0xff]
        %v476 = vld [vmem:[%s386 + $0x60] sm:$0xff]
        %v477 = vld [vmem:[%s386 + $0x68] sm:$0xff]
        %v478 = vld [vmem:[%s386 + $0x70] sm:$0xff]
        %v479 = vld [vmem:[%s386 + $0x78] sm:$0xff]
        %v480 = vld [vmem:[%s386 + $0x80] sm:$0xff]
        %v481 = vld [vmem:[%s386 + $0x88] sm:$0xff]
        %v482 = vld [vmem:[%s386 + $0x90] sm:$0xff]
        %v483 = vld [vmem:[%s386 + $0x98] sm:$0xff]
        %v484 = vld [vmem:[%s386 + $0xa0] sm:$0xff]
        %v485 = vld [vmem:[%s386 + $0xa8] sm:$0xff]
        %v486 = vld [vmem:[%s386 + $0xb0] sm:$0xff]
        %v487 = vld [vmem:[%s386 + $0xb8] sm:$0xff]
        %v488 = vld [vmem:[%s386 + $0xc0] sm:$0xff]
        %v489 = vld [vmem:[%s386 + $0xc8] sm:$0xff]
        %v490 = vld [vmem:[%s386 + $0xd0] sm:$0xff]
        %v491 = vld [vmem:[%s386 + $0xd8] sm:$0xff]
        %v492 = vld [vmem:[%s386 + $0xe0] sm:$0xff]
        %v493 = vld [vmem:[%s386 + $0xe8] sm:$0xff]
        %v494 = vld [vmem:[%s386 + $0xf0] sm:$0xff]
        %v495 = vld [vmem:[%s386 + $0xf8] sm:$0xff]
        %v496 = vld [vmem:[%s386 + $0x100] sm:$0xff]
        %v497 = vld [vmem:[%s386 + $0x108] sm:$0xff]
        %v498 = vld [vmem:[%s386 + $0x110] sm:$0xff]
        %v499 = vld [vmem:[%s386 + $0x118] sm:$0xff]
        %v500 = vld [vmem:[%s386 + $0x120] sm:$0xff]
        %v501 = vld [vmem:[%s386 + $0x128] sm:$0xff]
        %v502 = vld [vmem:[%s386 + $0x130] sm:$0xff]
        %v503 = vld [vmem:[%s386 + $0x138] sm:$0xff]
        %v504 = vld [vmem:[%s386 + $0x140] sm:$0xff]
        %v505 = vld [vmem:[%s386 + $0x148] sm:$0xff]
        %v506 = vld [vmem:[%s386 + $0x150] sm:$0xff]
        %v507 = vld [vmem:[%s386 + $0x158] sm:$0xff]
        %v508 = vld [vmem:[%s386 + $0x160] sm:$0xff]
        %v509 = vld [vmem:[%s386 + $0x168] sm:$0xff]
        %v510 = vld [vmem:[%s386 + $0x170] sm:$0xff]
        %v511 = vld [vmem:[%s386 + $0x178] sm:$0xff]
        %v512 = vld [vmem:[%s386 + $0x180] sm:$0xff]
        %v513 = vld [vmem:[%s386 + $0x188] sm:$0xff]
        %v514 = vld [vmem:[%s386 + $0x190] sm:$0xff]
        %v515 = vld [vmem:[%s386 + $0x198] sm:$0xff]
        %v516 = vld [vmem:[%s386 + $0x1a0] sm:$0xff]
        %v517 = vld [vmem:[%s386 + $0x1a8] sm:$0xff]
        %v518 = vld [vmem:[%s386 + $0x1b0] sm:$0xff]
        %v519 = vld [vmem:[%s386 + $0x1b8] sm:$0xff]
        %v520 = vld [vmem:[%s386 + $0x1c0] sm:$0xff]
        %v521 = vld [vmem:[%s386 + $0x1c8] sm:$0xff]
        %v522 = vld [vmem:[%s386 + $0x1d0] sm:$0xff]
        %v523 = vld [vmem:[%s386 + $0x1d8] sm:$0xff]
        %v524 = vld [vmem:[%s386 + $0x1e0] sm:$0xff]
        %v525 = vld [vmem:[%s386 + $0x1e8] sm:$0xff]
        %v526 = vld [vmem:[%s386 + $0x1f0] sm:$0xff]
        %v527 = vld [vmem:[%s386 + $0x1f8] sm:$0xff]
        %v528 = vld [vmem:[%s386 + $0x200] sm:$0xff]
        %v529 = vld [vmem:[%s386 + $0x208] sm:$0xff]
        %v530 = vld [vmem:[%s386 + $0x210] sm:$0xff]
        %v531 = vld [vmem:[%s386 + $0x218] sm:$0xff]
        %v532 = vld [vmem:[%s386 + $0x220] sm:$0xff]
        %v533 = vld [vmem:[%s386 + $0x228] sm:$0xff]
        %v534 = vld [vmem:[%s386 + $0x230] sm:$0xff]
        %v535 = vld [vmem:[%s386 + $0x238] sm:$0xff]
        %v536 = vld [vmem:[%s386 + $0x240] sm:$0xff]
        %v537 = vld [vmem:[%s386 + $0x248] sm:$0xff]
        %v538 = vld [vmem:[%s386 + $0x250] sm:$0xff]
        %v539 = vld [vmem:[%s386 + $0x258] sm:$0xff]
        %v540 = vld [vmem:[%s386 + $0x260] sm:$0xff]
        %v541 = vld [vmem:[%s386 + $0x268] sm:$0xff]
        %v542 = vld [vmem:[%s386 + $0x270] sm:$0xff]
        %v543 = vld [vmem:[%s386 + $0x278] sm:$0xff]
        %v544 = vld [vmem:[%s386 + $0x280] sm:$0xff]
        %v545 = vld [vmem:[%s386 + $0x288] sm:$0xff]
        %v546 = vld [vmem:[%s386 + $0x290] sm:$0xff]
        %v547 = vld [vmem:[%s386 + $0x298] sm:$0xff]
        %v548 = vld [vmem:[%s386 + $0x2a0] sm:$0xff]
        %v549 = vld [vmem:[%s386 + $0x2a8] sm:$0xff]
        %v550 = vld [vmem:[%s386 + $0x2b0] sm:$0xff]
        %v551 = vld [vmem:[%s386 + $0x2b8] sm:$0xff]
        %v552 = vld [vmem:[%s386 + $0x2c0] sm:$0xff]
        %v553 = vld [vmem:[%s386 + $0x2c8] sm:$0xff]
        %v554 = vld [vmem:[%s386 + $0x2d0] sm:$0xff]
        %v555 = vld [vmem:[%s386 + $0x2d8] sm:$0xff]
        %v556 = vld [vmem:[%s386 + $0x2e0] sm:$0xff]
        %v557 = vld [vmem:[%s386 + $0x2e8] sm:$0xff]
        %v558 = vld [vmem:[%s386 + $0x2f0] sm:$0xff]
        %v559 = vld [vmem:[%s386 + $0x2f8] sm:$0xff]
        %v560 = vld [vmem:[%s386 + $0x300] sm:$0xff]
        %v561 = vld [vmem:[%s386 + $0x308] sm:$0xff]
        %v562 = vld [vmem:[%s386 + $0x310] sm:$0xff]
        %v563 = vld [vmem:[%s386 + $0x318] sm:$0xff]
        %v564 = vld [vmem:[%s386 + $0x320] sm:$0xff]
        %v565 = vld [vmem:[%s386 + $0x328] sm:$0xff]
        %v566 = vld [vmem:[%s386 + $0x330] sm:$0xff]
        %v567 = vld [vmem:[%s386 + $0x338] sm:$0xff]
        %v568 = vld [vmem:[%s386 + $0x340] sm:$0xff]
        %v569 = vld [vmem:[%s386 + $0x348] sm:$0xff]
        %v570 = vld [vmem:[%s386 + $0x350] sm:$0xff]
        %v571 = vld [vmem:[%s386 + $0x358] sm:$0xff]
        %v572 = vld [vmem:[%s386 + $0x360] sm:$0xff]
        %v573 = vld [vmem:[%s386 + $0x368] sm:$0xff]
        %v574 = vld [vmem:[%s386 + $0x370] sm:$0xff]
        %v575 = vld [vmem:[%s386 + $0x378] sm:$0xff]
        %v576 = vld [vmem:[%s386 + $0x380] sm:$0xff]
        %v577 = vld [vmem:[%s386 + $0x388] sm:$0xff]
        %v578 = vld [vmem:[%s386 + $0x390] sm:$0xff]
        %v579 = vld [vmem:[%s386 + $0x398] sm:$0xff]
        %v580 = vld [vmem:[%s386 + $0x3a0] sm:$0xff]
        %v581 = vld [vmem:[%s386 + $0x3a8] sm:$0xff]
        %v582 = vld [vmem:[%s386 + $0x3b0] sm:$0xff]
        %v583 = vld [vmem:[%s386 + $0x3b8] sm:$0xff]
        %v584 = vld [vmem:[%s386 + $0x3c0] sm:$0xff]
        %v585 = vld [vmem:[%s386 + $0x3c8] sm:$0xff]
        %v586 = vld [vmem:[%s386 + $0x3d0] sm:$0xff]
        %v587 = vld [vmem:[%s386 + $0x3d8] sm:$0xff]
        %v588 = vld [vmem:[%s386 + $0x3e0] sm:$0xff]
        %v589 = vld [vmem:[%s386 + $0x3e8] sm:$0xff]
        %v590 = vld [vmem:[%s386 + $0x3f0] sm:$0xff]
        %v591 = vld [vmem:[%s386 + $0x3f8] sm:$0xff]
        %v592 = vld [vmem:[%s386 + $0x400] sm:$0xff]
        %v593 = vld [vmem:[%s386 + $0x408] sm:$0xff]
        %v594 = vld [vmem:[%s386 + $0x410] sm:$0xff]
        %v595 = vld [vmem:[%s386 + $0x418] sm:$0xff]
        %v596 = vld [vmem:[%s386 + $0x420] sm:$0xff]
        %v597 = vld [vmem:[%s386 + $0x428] sm:$0xff]
        %v598 = vld [vmem:[%s386 + $0x430] sm:$0xff]
        %v599 = vld [vmem:[%s386 + $0x438] sm:$0xff]
        %v600 = vld [vmem:[%s386 + $0x440] sm:$0xff]
        %v601 = vld [vmem:[%s386 + $0x448] sm:$0xff]
        %v602 = vld [vmem:[%s386 + $0x450] sm:$0xff]
        %v603 = vld [vmem:[%s386 + $0x458] sm:$0xff]
        %v604 = vld [vmem:[%s386 + $0x460] sm:$0xff]
        %v605 = vld [vmem:[%s386 + $0x468] sm:$0xff]
        %v606 = vld [vmem:[%s386 + $0x470] sm:$0xff]
        %v607 = vld [vmem:[%s386 + $0x478] sm:$0xff]
        %v608 = vld [vmem:[%s386 + $0x480] sm:$0xff]
        %v609 = vld [vmem:[%s386 + $0x488] sm:$0xff]
        %v610 = vld [vmem:[%s386 + $0x490] sm:$0xff]
        %v611 = vld [vmem:[%s386 + $0x498] sm:$0xff]
        %v612 = vld [vmem:[%s386 + $0x4a0] sm:$0xff]
        %v613 = vld [vmem:[%s386 + $0x4a8] sm:$0xff]
        %v614 = vld [vmem:[%s386 + $0x4b0] sm:$0xff]
        %v615 = vld [vmem:[%s386 + $0x4b8] sm:$0xff]
        %v616 = vld [vmem:[%s386 + $0x4c0] sm:$0xff]
        %v617 = vld [vmem:[%s386 + $0x4c8] sm:$0xff]
        %v618 = vld [vmem:[%s386 + $0x4d0] sm:$0xff]
        %v619 = vld [vmem:[%s386 + $0x4d8] sm:$0xff]
        %v620 = vld [vmem:[%s386 + $0x4e0] sm:$0xff]
        %v621 = vld [vmem:[%s386 + $0x4e8] sm:$0xff]
        %v622 = vld [vmem:[%s386 + $0x4f0] sm:$0xff]
        %v623 = vld [vmem:[%s386 + $0x4f8] sm:$0xff]
        %v624 = vld [vmem:[%s386 + $0x500] sm:$0xff]
        %v625 = vld [vmem:[%s386 + $0x508] sm:$0xff]
        %v626 = vld [vmem:[%s386 + $0x510] sm:$0xff]
        %v627 = vld [vmem:[%s386 + $0x518] sm:$0xff]
        %v628 = vld [vmem:[%s386 + $0x520] sm:$0xff]
        %v629 = vld [vmem:[%s386 + $0x528] sm:$0xff]
        %v630 = vld [vmem:[%s386 + $0x530] sm:$0xff]
        %v631 = vld [vmem:[%s386 + $0x538] sm:$0xff]
        %v632 = vld [vmem:[%s386 + $0x540] sm:$0xff]
        %v633 = vld [vmem:[%s386 + $0x548] sm:$0xff]
        %v634 = vld [vmem:[%s386 + $0x550] sm:$0xff]
        %v635 = vld [vmem:[%s386 + $0x558] sm:$0xff]
        %v636 = vld [vmem:[%s386 + $0x560] sm:$0xff]
        %v637 = vld [vmem:[%s386 + $0x568] sm:$0xff]
        %v638 = vld [vmem:[%s386 + $0x570] sm:$0xff]
        %v639 = vld [vmem:[%s386 + $0x578] sm:$0xff]
        %v640 = vld [vmem:[%s386 + $0x580] sm:$0xff]
        %v641 = vld [vmem:[%s386 + $0x588] sm:$0xff]
        %v642 = vld [vmem:[%s386 + $0x590] sm:$0xff]
        %v643 = vld [vmem:[%s386 + $0x598] sm:$0xff]
        %v644 = vld [vmem:[%s386 + $0x5a0] sm:$0xff]
        %v645 = vld [vmem:[%s386 + $0x5a8] sm:$0xff]
        %v646 = vld [vmem:[%s386 + $0x5b0] sm:$0xff]
        %v647 = vld [vmem:[%s386 + $0x5b8] sm:$0xff]
        %v648 = vld [vmem:[%s386 + $0x5c0] sm:$0xff]
        %v649 = vld [vmem:[%s386 + $0x5c8] sm:$0xff]
        %v650 = vld [vmem:[%s386 + $0x5d0] sm:$0xff]
        %v651 = vld [vmem:[%s386 + $0x5d8] sm:$0xff]
        %v652 = vld [vmem:[%s386 + $0x5e0] sm:$0xff]
        %v653 = vld [vmem:[%s386 + $0x5e8] sm:$0xff]
        %v654 = vld [vmem:[%s386 + $0x5f0] sm:$0xff]
        %v655 = vld [vmem:[%s386 + $0x5f8] sm:$0xff]
        %v656 = vld [vmem:[%s386 + $0x600] sm:$0xff]
        %v657 = vld [vmem:[%s386 + $0x608] sm:$0xff]
        %v658 = vld [vmem:[%s386 + $0x610] sm:$0xff]
        %v659 = vld [vmem:[%s386 + $0x618] sm:$0xff]
        %v660 = vld [vmem:[%s386 + $0x620] sm:$0xff]
        %v661 = vld [vmem:[%s386 + $0x628] sm:$0xff]
        %v662 = vld [vmem:[%s386 + $0x630] sm:$0xff]
        %v663 = vld [vmem:[%s386 + $0x638] sm:$0xff]
        %v664 = vld [vmem:[%s386 + $0x640] sm:$0xff]
        %v665 = vld [vmem:[%s386 + $0x648] sm:$0xff]
        %v666 = vld [vmem:[%s386 + $0x650] sm:$0xff]
        %v667 = vld [vmem:[%s386 + $0x658] sm:$0xff]
        %v668 = vld [vmem:[%s386 + $0x660] sm:$0xff]
        %v669 = vld [vmem:[%s386 + $0x668] sm:$0xff]
        %v670 = vld [vmem:[%s386 + $0x670] sm:$0xff]
        %v671 = vld [vmem:[%s386 + $0x678] sm:$0xff]
        %v672 = vld [vmem:[%s386 + $0x680] sm:$0xff]
        %v673 = vld [vmem:[%s386 + $0x688] sm:$0xff]
        %v674 = vld [vmem:[%s386 + $0x690] sm:$0xff]
        %v675 = vld [vmem:[%s386 + $0x698] sm:$0xff]
        %v676 = vld [vmem:[%s386 + $0x6a0] sm:$0xff]
        %v677 = vld [vmem:[%s386 + $0x6a8] sm:$0xff]
        %v678 = vld [vmem:[%s386 + $0x6b0] sm:$0xff]
        %v679 = vld [vmem:[%s386 + $0x6b8] sm:$0xff]
        %v680 = vld [vmem:[%s386 + $0x6c0] sm:$0xff]
        %v681 = vld [vmem:[%s386 + $0x6c8] sm:$0xff]
        %v682 = vld [vmem:[%s386 + $0x6d0] sm:$0xff]
        %v683 = vld [vmem:[%s386 + $0x6d8] sm:$0xff]
        %v684 = vld [vmem:[%s386 + $0x6e0] sm:$0xff]
        %v685 = vld [vmem:[%s386 + $0x6e8] sm:$0xff]
        %v686 = vld [vmem:[%s386 + $0x6f0] sm:$0xff]
        %v687 = vld [vmem:[%s386 + $0x6f8] sm:$0xff]
        %v688 = vld [vmem:[%s386 + $0x700] sm:$0xff]
        %v689 = vld [vmem:[%s386 + $0x708] sm:$0xff]
        %v690 = vld [vmem:[%s386 + $0x710] sm:$0xff]
        %v691 = vld [vmem:[%s386 + $0x718] sm:$0xff]
        %v692 = vld [vmem:[%s386 + $0x720] sm:$0xff]
        %v693 = vld [vmem:[%s386 + $0x728] sm:$0xff]
        %v694 = vld [vmem:[%s386 + $0x730] sm:$0xff]
        %v695 = vld [vmem:[%s386 + $0x738] sm:$0xff]
        %v696 = vld [vmem:[%s386 + $0x740] sm:$0xff]
        %v697 = vld [vmem:[%s386 + $0x748] sm:$0xff]
        %v698 = vld [vmem:[%s386 + $0x750] sm:$0xff]
        %v699 = vld [vmem:[%s386 + $0x758] sm:$0xff]
        %v700 = vld [vmem:[%s386 + $0x760] sm:$0xff]
        %v701 = vld [vmem:[%s386 + $0x768] sm:$0xff]
        %v702 = vld [vmem:[%s386 + $0x770] sm:$0xff]
        %v703 = vld [vmem:[%s386 + $0x778] sm:$0xff]
        %v704 = vld [vmem:[%s386 + $0x780] sm:$0xff]
        %v705 = vld [vmem:[%s386 + $0x788] sm:$0xff]
        %v706 = vld [vmem:[%s386 + $0x790] sm:$0xff]
        %v707 = vld [vmem:[%s386 + $0x798] sm:$0xff]
        %v708 = vld [vmem:[%s386 + $0x7a0] sm:$0xff]
        %v709 = vld [vmem:[%s386 + $0x7a8] sm:$0xff]
        %v710 = vld [vmem:[%s386 + $0x7b0] sm:$0xff]
        %v711 = vld [vmem:[%s386 + $0x7b8] sm:$0xff]
        %v712 = vld [vmem:[%s386 + $0x7c0] sm:$0xff]
        %v713 = vld [vmem:[%s386 + $0x7c8] sm:$0xff]
        %v714 = vld [vmem:[%s386 + $0x7d0] sm:$0xff]
        %v715 = vld [vmem:[%s386 + $0x7d8] sm:$0xff]
        %v716 = vld [vmem:[%s386 + $0x7e0] sm:$0xff]
        %v717 = vld [vmem:[%s386 + $0x7e8] sm:$0xff]
        %v718 = vld [vmem:[%s386 + $0x7f0] sm:$0xff]
        %v719 = vld [vmem:[%s386 + $0x7f8] sm:$0xff]
        %v722 = vunpack.c.l.b16 %v462
        %v723 = vunpack.c.h.b16 %v462
        %v724 = vunpack.c.l.b16 %v463
        %v725 = vunpack.c.h.b16 %v463
        %v726 = vpack.c.b16 %v722, %v722
        %v727 = vpack.c.b16 %v723, %v723
        %v728 = vpack.c.b16 %v724, %v724
        %v729 = vpack.c.b16 %v725, %v725
        %v990 = vunpack.c.l.b16 %v464
        %v991 = vunpack.c.h.b16 %v464
        %v992 = vunpack.c.l.b16 %v465
        %v993 = vunpack.c.h.b16 %v465
        %v994 = vunpack.c.l.b16 %v466
        %v995 = vunpack.c.h.b16 %v466
        %v996 = vunpack.c.l.b16 %v467
        %v997 = vunpack.c.h.b16 %v467
        %v998 = vunpack.c.l.b16 %v468
        %v999 = vunpack.c.h.b16 %v468
        %v1000 = vunpack.c.l.b16 %v469
        %v1001 = vunpack.c.h.b16 %v469
        %v1002 = vunpack.c.l.b16 %v470
        %v1003 = vunpack.c.h.b16 %v470
        %v1004 = vunpack.c.l.b16 %v471
        %v1005 = vunpack.c.h.b16 %v471
        %v1006 = vunpack.c.l.b16 %v472
        %v1007 = vunpack.c.h.b16 %v472
        %v1008 = vunpack.c.l.b16 %v473
        %v1009 = vunpack.c.h.b16 %v473
        %v1010 = vunpack.c.l.b16 %v474
        %v1011 = vunpack.c.h.b16 %v474
        %v1012 = vunpack.c.l.b16 %v475
        %v1013 = vunpack.c.h.b16 %v475
        %v1014 = vunpack.c.l.b16 %v476
        %v1015 = vunpack.c.h.b16 %v476
        %v1016 = vunpack.c.l.b16 %v477
        %v1017 = vunpack.c.h.b16 %v477
        %v1018 = vunpack.c.l.b16 %v478
        %v1019 = vunpack.c.h.b16 %v478
        %v1020 = vunpack.c.l.b16 %v479
        %v1021 = vunpack.c.h.b16 %v479
        %v1022 = vunpack.c.l.b16 %v480
        %v1023 = vunpack.c.h.b16 %v480
        %v1024 = vunpack.c.l.b16 %v481
        %v1025 = vunpack.c.h.b16 %v481
        %v1026 = vunpack.c.l.b16 %v482
        %v1027 = vunpack.c.h.b16 %v482
        %v1028 = vunpack.c.l.b16 %v483
        %v1029 = vunpack.c.h.b16 %v483
        %v1030 = vunpack.c.l.b16 %v484
        %v1031 = vunpack.c.h.b16 %v484
        %v1032 = vunpack.c.l.b16 %v485
        %v1033 = vunpack.c.h.b16 %v485
        %v1034 = vunpack.c.l.b16 %v486
        %v1035 = vunpack.c.h.b16 %v486
        %v1036 = vunpack.c.l.b16 %v487
        %v1037 = vunpack.c.h.b16 %v487
        %v1038 = vunpack.c.l.b16 %v488
        %v1039 = vunpack.c.h.b16 %v488
        %v1040 = vunpack.c.l.b16 %v489
        %v1041 = vunpack.c.h.b16 %v489
        %v1042 = vunpack.c.l.b16 %v490
        %v1043 = vunpack.c.h.b16 %v490
        %v1044 = vunpack.c.l.b16 %v491
        %v1045 = vunpack.c.h.b16 %v491
        %v1046 = vunpack.c.l.b16 %v492
        %v1047 = vunpack.c.h.b16 %v492
        %v1048 = vunpack.c.l.b16 %v493
        %v1049 = vunpack.c.h.b16 %v493
        %v1050 = vunpack.c.l.b16 %v494
        %v1051 = vunpack.c.h.b16 %v494
        %v1052 = vunpack.c.l.b16 %v495
        %v1053 = vunpack.c.h.b16 %v495
        %v1054 = vunpack.c.l.b16 %v496
        %v1055 = vunpack.c.h.b16 %v496
        %v1056 = vunpack.c.l.b16 %v497
        %v1057 = vunpack.c.h.b16 %v497
        %v1058 = vunpack.c.l.b16 %v498
        %v1059 = vunpack.c.h.b16 %v498
        %v1060 = vunpack.c.l.b16 %v499
        %v1061 = vunpack.c.h.b16 %v499
        %v1062 = vunpack.c.l.b16 %v500
        %v1063 = vunpack.c.h.b16 %v500
        %v1064 = vunpack.c.l.b16 %v501
        %v1065 = vunpack.c.h.b16 %v501
        %v1066 = vunpack.c.l.b16 %v502
        %v1067 = vunpack.c.h.b16 %v502
        %v1068 = vunpack.c.l.b16 %v503
        %v1069 = vunpack.c.h.b16 %v503
        %v1070 = vunpack.c.l.b16 %v504
        %v1071 = vunpack.c.h.b16 %v504
        %v1072 = vunpack.c.l.b16 %v505
        %v1073 = vunpack.c.h.b16 %v505
        %v1074 = vunpack.c.l.b16 %v506
        %v1075 = vunpack.c.h.b16 %v506
        %v1076 = vunpack.c.l.b16 %v507
        %v1077 = vunpack.c.h.b16 %v507
        %v1078 = vunpack.c.l.b16 %v508
        %v1079 = vunpack.c.h.b16 %v508
        %v1080 = vunpack.c.l.b16 %v509
        %v1081 = vunpack.c.h.b16 %v509
        %v1082 = vunpack.c.l.b16 %v510
        %v1083 = vunpack.c.h.b16 %v510
        %v1084 = vunpack.c.l.b16 %v511
        %v1085 = vunpack.c.h.b16 %v511
        %v1086 = vunpack.c.l.b16 %v512
        %v1087 = vunpack.c.h.b16 %v512
        %v1088 = vunpack.c.l.b16 %v513
        %v1089 = vunpack.c.h.b16 %v513
        %v1090 = vunpack.c.l.b16 %v514
        %v1091 = vunpack.c.h.b16 %v514
        %v1092 = vunpack.c.l.b16 %v515
        %v1093 = vunpack.c.h.b16 %v515
        %v1094 = vunpack.c.l.b16 %v516
        %v1095 = vunpack.c.h.b16 %v516
        %v1096 = vunpack.c.l.b16 %v517
        %v1097 = vunpack.c.h.b16 %v517
        %v1098 = vunpack.c.l.b16 %v518
        %v1099 = vunpack.c.h.b16 %v518
        %v1100 = vunpack.c.l.b16 %v519
        %v1101 = vunpack.c.h.b16 %v519
        %v1102 = vunpack.c.l.b16 %v520
        %v1103 = vunpack.c.h.b16 %v520
        %v1104 = vunpack.c.l.b16 %v521
        %v1105 = vunpack.c.h.b16 %v521
        %v1106 = vunpack.c.l.b16 %v522
        %v1107 = vunpack.c.h.b16 %v522
        %v1108 = vunpack.c.l.b16 %v523
        %v1109 = vunpack.c.h.b16 %v523
        %v1110 = vunpack.c.l.b16 %v524
        %v1111 = vunpack.c.h.b16 %v524
        %v1112 = vunpack.c.l.b16 %v525
        %v1113 = vunpack.c.h.b16 %v525
        %v1114 = vunpack.c.l.b16 %v526
        %v1115 = vunpack.c.h.b16 %v526
        %v1116 = vunpack.c.l.b16 %v527
        %v1117 = vunpack.c.h.b16 %v527
        %v1118 = vunpack.c.l.b16 %v528
        %v1119 = vunpack.c.h.b16 %v528
        %v1120 = vunpack.c.l.b16 %v529
        %v1121 = vunpack.c.h.b16 %v529
        %v1122 = vunpack.c.l.b16 %v530
        %v1123 = vunpack.c.h.b16 %v530
        %v1124 = vunpack.c.l.b16 %v531
        %v1125 = vunpack.c.h.b16 %v531
        %v1126 = vunpack.c.l.b16 %v532
        %v1127 = vunpack.c.h.b16 %v532
        %v1128 = vunpack.c.l.b16 %v533
        %v1129 = vunpack.c.h.b16 %v533
        %v1130 = vunpack.c.l.b16 %v534
        %v1131 = vunpack.c.h.b16 %v534
        %v1132 = vunpack.c.l.b16 %v535
        %v1133 = vunpack.c.h.b16 %v535
        %v1134 = vunpack.c.l.b16 %v536
        %v1135 = vunpack.c.h.b16 %v536
        %v1136 = vunpack.c.l.b16 %v537
        %v1137 = vunpack.c.h.b16 %v537
        %v1138 = vunpack.c.l.b16 %v538
        %v1139 = vunpack.c.h.b16 %v538
        %v1140 = vunpack.c.l.b16 %v539
        %v1141 = vunpack.c.h.b16 %v539
        %v1142 = vunpack.c.l.b16 %v540
        %v1143 = vunpack.c.h.b16 %v540
        %v1144 = vunpack.c.l.b16 %v541
        %v1145 = vunpack.c.h.b16 %v541
        %v1146 = vunpack.c.l.b16 %v542
        %v1147 = vunpack.c.h.b16 %v542
        %v1148 = vunpack.c.l.b16 %v543
        %v1149 = vunpack.c.h.b16 %v543
        %v1150 = vunpack.c.l.b16 %v544
        %v1151 = vunpack.c.h.b16 %v544
        %v1152 = vunpack.c.l.b16 %v545
        %v1153 = vunpack.c.h.b16 %v545
        %v1154 = vunpack.c.l.b16 %v546
        %v1155 = vunpack.c.h.b16 %v546
        %v1156 = vunpack.c.l.b16 %v547
        %v1157 = vunpack.c.h.b16 %v547
        %v1158 = vunpack.c.l.b16 %v548
        %v1159 = vunpack.c.h.b16 %v548
        %v1160 = vunpack.c.l.b16 %v549
        %v1161 = vunpack.c.h.b16 %v549
        %v1162 = vunpack.c.l.b16 %v550
        %v1163 = vunpack.c.h.b16 %v550
        %v1164 = vunpack.c.l.b16 %v551
        %v1165 = vunpack.c.h.b16 %v551
        %v1166 = vunpack.c.l.b16 %v552
        %v1167 = vunpack.c.h.b16 %v552
        %v1168 = vunpack.c.l.b16 %v553
        %v1169 = vunpack.c.h.b16 %v553
        %v1170 = vunpack.c.l.b16 %v554
        %v1171 = vunpack.c.h.b16 %v554
        %v1172 = vunpack.c.l.b16 %v555
        %v1173 = vunpack.c.h.b16 %v555
        %v1174 = vunpack.c.l.b16 %v556
        %v1175 = vunpack.c.h.b16 %v556
        %v1176 = vunpack.c.l.b16 %v557
        %v1177 = vunpack.c.h.b16 %v557
        %v1178 = vunpack.c.l.b16 %v558
        %v1179 = vunpack.c.h.b16 %v558
        %v1180 = vunpack.c.l.b16 %v559
        %v1181 = vunpack.c.h.b16 %v559
        %v1182 = vunpack.c.l.b16 %v560
        %v1183 = vunpack.c.h.b16 %v560
        %v1184 = vunpack.c.l.b16 %v561
        %v1185 = vunpack.c.h.b16 %v561
        %v1186 = vunpack.c.l.b16 %v562
        %v1187 = vunpack.c.h.b16 %v562
        %v1188 = vunpack.c.l.b16 %v563
        %v1189 = vunpack.c.h.b16 %v563
        %v1190 = vunpack.c.l.b16 %v564
        %v1191 = vunpack.c.h.b16 %v564
        %v1192 = vunpack.c.l.b16 %v565
        %v1193 = vunpack.c.h.b16 %v565
        %v1194 = vunpack.c.l.b16 %v566
        %v1195 = vunpack.c.h.b16 %v566
        %v1196 = vunpack.c.l.b16 %v567
        %v1197 = vunpack.c.h.b16 %v567
        %v1198 = vunpack.c.l.b16 %v568
        %v1199 = vunpack.c.h.b16 %v568
        %v1200 = vunpack.c.l.b16 %v569
        %v1201 = vunpack.c.h.b16 %v569
        %v1202 = vunpack.c.l.b16 %v570
        %v1203 = vunpack.c.h.b16 %v570
        %v1204 = vunpack.c.l.b16 %v571
        %v1205 = vunpack.c.h.b16 %v571
        %v1206 = vunpack.c.l.b16 %v572
        %v1207 = vunpack.c.h.b16 %v572
        %v1208 = vunpack.c.l.b16 %v573
        %v1209 = vunpack.c.h.b16 %v573
        %v1210 = vunpack.c.l.b16 %v574
        %v1211 = vunpack.c.h.b16 %v574
        %v1212 = vunpack.c.l.b16 %v575
        %v1213 = vunpack.c.h.b16 %v575
        %v1214 = vunpack.c.l.b16 %v576
        %v1215 = vunpack.c.h.b16 %v576
        %v1216 = vunpack.c.l.b16 %v577
        %v1217 = vunpack.c.h.b16 %v577
        %v1218 = vunpack.c.l.b16 %v578
        %v1219 = vunpack.c.h.b16 %v578
        %v1220 = vunpack.c.l.b16 %v579
        %v1221 = vunpack.c.h.b16 %v579
        %v1222 = vunpack.c.l.b16 %v580
        %v1223 = vunpack.c.h.b16 %v580
        %v1224 = vunpack.c.l.b16 %v581
        %v1225 = vunpack.c.h.b16 %v581
        %v1226 = vunpack.c.l.b16 %v582
        %v1227 = vunpack.c.h.b16 %v582
        %v1228 = vunpack.c.l.b16 %v583
        %v1229 = vunpack.c.h.b16 %v583
        %v1230 = vunpack.c.l.b16 %v584
        %v1231 = vunpack.c.h.b16 %v584
        %v1232 = vunpack.c.l.b16 %v585
        %v1233 = vunpack.c.h.b16 %v585
        %v1234 = vunpack.c.l.b16 %v586
        %v1235 = vunpack.c.h.b16 %v586
        %v1236 = vunpack.c.l.b16 %v587
        %v1237 = vunpack.c.h.b16 %v587
        %v1238 = vunpack.c.l.b16 %v588
        %v1239 = vunpack.c.h.b16 %v588
        %v1240 = vunpack.c.l.b16 %v589
        %v1241 = vunpack.c.h.b16 %v589
        %v1242 = vunpack.c.l.b16 %v590
        %v1243 = vunpack.c.h.b16 %v590
        %v1244 = vunpack.c.l.b16 %v591
        %v1245 = vunpack.c.h.b16 %v591
        %v1246 = vunpack.c.l.b16 %v592
        %v1247 = vunpack.c.h.b16 %v592
        %v1248 = vunpack.c.l.b16 %v593
        %v1249 = vunpack.c.h.b16 %v593
        %v1250 = vunpack.c.l.b16 %v594
        %v1251 = vunpack.c.h.b16 %v594
        %v1252 = vunpack.c.l.b16 %v595
        %v1253 = vunpack.c.h.b16 %v595
        %v1254 = vunpack.c.l.b16 %v596
        %v1255 = vunpack.c.h.b16 %v596
        %v1256 = vunpack.c.l.b16 %v597
        %v1257 = vunpack.c.h.b16 %v597
        %v1258 = vunpack.c.l.b16 %v598
        %v1259 = vunpack.c.h.b16 %v598
        %v1260 = vunpack.c.l.b16 %v599
        %v1261 = vunpack.c.h.b16 %v599
        %v1262 = vunpack.c.l.b16 %v600
        %v1263 = vunpack.c.h.b16 %v600
        %v1264 = vunpack.c.l.b16 %v601
        %v1265 = vunpack.c.h.b16 %v601
        %v1266 = vunpack.c.l.b16 %v602
        %v1267 = vunpack.c.h.b16 %v602
        %v1268 = vunpack.c.l.b16 %v603
        %v1269 = vunpack.c.h.b16 %v603
        %v1270 = vunpack.c.l.b16 %v604
        %v1271 = vunpack.c.h.b16 %v604
        %v1272 = vunpack.c.l.b16 %v605
        %v1273 = vunpack.c.h.b16 %v605
        %v1274 = vunpack.c.l.b16 %v606
        %v1275 = vunpack.c.h.b16 %v606
        %v1276 = vunpack.c.l.b16 %v607
        %v1277 = vunpack.c.h.b16 %v607
        %v1278 = vunpack.c.l.b16 %v608
        %v1279 = vunpack.c.h.b16 %v608
        %v1280 = vunpack.c.l.b16 %v609
        %v1281 = vunpack.c.h.b16 %v609
        %v1282 = vunpack.c.l.b16 %v610
        %v1283 = vunpack.c.h.b16 %v610
        %v1284 = vunpack.c.l.b16 %v611
        %v1285 = vunpack.c.h.b16 %v611
        %v1286 = vunpack.c.l.b16 %v612
        %v1287 = vunpack.c.h.b16 %v612
        %v1288 = vunpack.c.l.b16 %v613
        %v1289 = vunpack.c.h.b16 %v613
        %v1290 = vunpack.c.l.b16 %v614
        %v1291 = vunpack.c.h.b16 %v614
        %v1292 = vunpack.c.l.b16 %v615
        %v1293 = vunpack.c.h.b16 %v615
        %v1294 = vunpack.c.l.b16 %v616
        %v1295 = vunpack.c.h.b16 %v616
        %v1296 = vunpack.c.l.b16 %v617
        %v1297 = vunpack.c.h.b16 %v617
        %v1298 = vunpack.c.l.b16 %v618
        %v1299 = vunpack.c.h.b16 %v618
        %v1300 = vunpack.c.l.b16 %v619
        %v1301 = vunpack.c.h.b16 %v619
        %v1302 = vunpack.c.l.b16 %v620
        %v1303 = vunpack.c.h.b16 %v620
        %v1304 = vunpack.c.l.b16 %v621
        %v1305 = vunpack.c.h.b16 %v621
        %v1306 = vunpack.c.l.b16 %v622
        %v1307 = vunpack.c.h.b16 %v622
        %v1308 = vunpack.c.l.b16 %v623
        %v1309 = vunpack.c.h.b16 %v623
        %v1310 = vunpack.c.l.b16 %v624
        %v1311 = vunpack.c.h.b16 %v624
        %v1312 = vunpack.c.l.b16 %v625
        %v1313 = vunpack.c.h.b16 %v625
        %v1314 = vunpack.c.l.b16 %v626
        %v1315 = vunpack.c.h.b16 %v626
        %v1316 = vunpack.c.l.b16 %v627
        %v1317 = vunpack.c.h.b16 %v627
        %v1318 = vunpack.c.l.b16 %v628
        %v1319 = vunpack.c.h.b16 %v628
        %v1320 = vunpack.c.l.b16 %v629
        %v1321 = vunpack.c.h.b16 %v629
        %v1322 = vunpack.c.l.b16 %v630
        %v1323 = vunpack.c.h.b16 %v630
        %v1324 = vunpack.c.l.b16 %v631
        %v1325 = vunpack.c.h.b16 %v631
        %v1326 = vunpack.c.l.b16 %v632
        %v1327 = vunpack.c.h.b16 %v632
        %v1328 = vunpack.c.l.b16 %v633
        %v1329 = vunpack.c.h.b16 %v633
        %v1330 = vunpack.c.l.b16 %v634
        %v1331 = vunpack.c.h.b16 %v634
        %v1332 = vunpack.c.l.b16 %v635
        %v1333 = vunpack.c.h.b16 %v635
        %v1334 = vunpack.c.l.b16 %v636
        %v1335 = vunpack.c.h.b16 %v636
        %v1336 = vunpack.c.l.b16 %v637
        %v1337 = vunpack.c.h.b16 %v637
        %v1338 = vunpack.c.l.b16 %v638
        %v1339 = vunpack.c.h.b16 %v638
        %v1340 = vunpack.c.l.b16 %v639
        %v1341 = vunpack.c.h.b16 %v639
        %v1342 = vunpack.c.l.b16 %v640
        %v1343 = vunpack.c.h.b16 %v640
        %v1344 = vunpack.c.l.b16 %v641
        %v1345 = vunpack.c.h.b16 %v641
        %v1346 = vunpack.c.l.b16 %v642
        %v1347 = vunpack.c.h.b16 %v642
        %v1348 = vunpack.c.l.b16 %v643
        %v1349 = vunpack.c.h.b16 %v643
        %v1350 = vunpack.c.l.b16 %v644
        %v1351 = vunpack.c.h.b16 %v644
        %v1352 = vunpack.c.l.b16 %v645
        %v1353 = vunpack.c.h.b16 %v645
        %v1354 = vunpack.c.l.b16 %v646
        %v1355 = vunpack.c.h.b16 %v646
        %v1356 = vunpack.c.l.b16 %v647
        %v1357 = vunpack.c.h.b16 %v647
        %v1358 = vunpack.c.l.b16 %v648
        %v1359 = vunpack.c.h.b16 %v648
        %v1360 = vunpack.c.l.b16 %v649
        %v1361 = vunpack.c.h.b16 %v649
        %v1362 = vunpack.c.l.b16 %v650
        %v1363 = vunpack.c.h.b16 %v650
        %v1364 = vunpack.c.l.b16 %v651
        %v1365 = vunpack.c.h.b16 %v651
        %v1366 = vunpack.c.l.b16 %v652
        %v1367 = vunpack.c.h.b16 %v652
        %v1368 = vunpack.c.l.b16 %v653
        %v1369 = vunpack.c.h.b16 %v653
        %v1370 = vunpack.c.l.b16 %v654
        %v1371 = vunpack.c.h.b16 %v654
        %v1372 = vunpack.c.l.b16 %v655
        %v1373 = vunpack.c.h.b16 %v655
        %v1374 = vunpack.c.l.b16 %v656
        %v1375 = vunpack.c.h.b16 %v656
        %v1376 = vunpack.c.l.b16 %v657
        %v1377 = vunpack.c.h.b16 %v657
        %v1378 = vunpack.c.l.b16 %v658
        %v1379 = vunpack.c.h.b16 %v658
        %v1380 = vunpack.c.l.b16 %v659
        %v1381 = vunpack.c.h.b16 %v659
        %v1382 = vunpack.c.l.b16 %v660
        %v1383 = vunpack.c.h.b16 %v660
        %v1384 = vunpack.c.l.b16 %v661
        %v1385 = vunpack.c.h.b16 %v661
        %v1386 = vunpack.c.l.b16 %v662
        %v1387 = vunpack.c.h.b16 %v662
        %v1388 = vunpack.c.l.b16 %v663
        %v1389 = vunpack.c.h.b16 %v663
        %v1390 = vunpack.c.l.b16 %v664
        %v1391 = vunpack.c.h.b16 %v664
        %v1392 = vunpack.c.l.b16 %v665
        %v1393 = vunpack.c.h.b16 %v665
        %v1394 = vunpack.c.l.b16 %v666
        %v1395 = vunpack.c.h.b16 %v666
        %v1396 = vunpack.c.l.b16 %v667
        %v1397 = vunpack.c.h.b16 %v667
        %v1398 = vunpack.c.l.b16 %v668
        %v1399 = vunpack.c.h.b16 %v668
        %v1400 = vunpack.c.l.b16 %v669
        %v1401 = vunpack.c.h.b16 %v669
        %v1402 = vunpack.c.l.b16 %v670
        %v1403 = vunpack.c.h.b16 %v670
        %v1404 = vunpack.c.l.b16 %v671
        %v1405 = vunpack.c.h.b16 %v671
        %v1406 = vunpack.c.l.b16 %v672
        %v1407 = vunpack.c.h.b16 %v672
        %v1408 = vunpack.c.l.b16 %v673
        %v1409 = vunpack.c.h.b16 %v673
        %v1410 = vunpack.c.l.b16 %v674
        %v1411 = vunpack.c.h.b16 %v674
        %v1412 = vunpack.c.l.b16 %v675
        %v1413 = vunpack.c.h.b16 %v675
        %v1414 = vunpack.c.l.b16 %v676
        %v1415 = vunpack.c.h.b16 %v676
        %v1416 = vunpack.c.l.b16 %v677
        %v1417 = vunpack.c.h.b16 %v677
        %v1418 = vunpack.c.l.b16 %v678
        %v1419 = vunpack.c.h.b16 %v678
        %v1420 = vunpack.c.l.b16 %v679
        %v1421 = vunpack.c.h.b16 %v679
        %v1422 = vunpack.c.l.b16 %v680
        %v1423 = vunpack.c.h.b16 %v680
        %v1424 = vunpack.c.l.b16 %v681
        %v1425 = vunpack.c.h.b16 %v681
        %v1426 = vunpack.c.l.b16 %v682
        %v1427 = vunpack.c.h.b16 %v682
        %v1428 = vunpack.c.l.b16 %v683
        %v1429 = vunpack.c.h.b16 %v683
        %v1430 = vunpack.c.l.b16 %v684
        %v1431 = vunpack.c.h.b16 %v684
        %v1432 = vunpack.c.l.b16 %v685
        %v1433 = vunpack.c.h.b16 %v685
        %v1434 = vunpack.c.l.b16 %v686
        %v1435 = vunpack.c.h.b16 %v686
        %v1436 = vunpack.c.l.b16 %v687
        %v1437 = vunpack.c.h.b16 %v687
        %v1438 = vunpack.c.l.b16 %v688
        %v1439 = vunpack.c.h.b16 %v688
        %v1440 = vunpack.c.l.b16 %v689
        %v1441 = vunpack.c.h.b16 %v689
        %v1442 = vunpack.c.l.b16 %v690
        %v1443 = vunpack.c.h.b16 %v690
        %v1444 = vunpack.c.l.b16 %v691
        %v1445 = vunpack.c.h.b16 %v691
        %v1446 = vunpack.c.l.b16 %v692
        %v1447 = vunpack.c.h.b16 %v692
        %v1448 = vunpack.c.l.b16 %v693
        %v1449 = vunpack.c.h.b16 %v693
        %v1450 = vunpack.c.l.b16 %v694
        %v1451 = vunpack.c.h.b16 %v694
        %v1452 = vunpack.c.l.b16 %v695
        %v1453 = vunpack.c.h.b16 %v695
        %v1454 = vunpack.c.l.b16 %v696
        %v1455 = vunpack.c.h.b16 %v696
        %v1456 = vunpack.c.l.b16 %v697
        %v1457 = vunpack.c.h.b16 %v697
        %v1458 = vunpack.c.l.b16 %v698
        %v1459 = vunpack.c.h.b16 %v698
        %v1460 = vunpack.c.l.b16 %v699
        %v1461 = vunpack.c.h.b16 %v699
        %v1462 = vunpack.c.l.b16 %v700
        %v1463 = vunpack.c.h.b16 %v700
        %v1464 = vunpack.c.l.b16 %v701
        %v1465 = vunpack.c.h.b16 %v701
        %v1466 = vunpack.c.l.b16 %v702
        %v1467 = vunpack.c.h.b16 %v702
        %v1468 = vunpack.c.l.b16 %v703
        %v1469 = vunpack.c.h.b16 %v703
        %v1470 = vunpack.c.l.b16 %v704
        %v1471 = vunpack.c.h.b16 %v704
        %v1472 = vunpack.c.l.b16 %v705
        %v1473 = vunpack.c.h.b16 %v705
        %v1474 = vunpack.c.l.b16 %v706
        %v1475 = vunpack.c.h.b16 %v706
        %v1476 = vunpack.c.l.b16 %v707
        %v1477 = vunpack.c.h.b16 %v707
        %v1478 = vunpack.c.l.b16 %v708
        %v1479 = vunpack.c.h.b16 %v708
        %v1480 = vunpack.c.l.b16 %v709
        %v1481 = vunpack.c.h.b16 %v709
        %v1482 = vunpack.c.l.b16 %v710
        %v1483 = vunpack.c.h.b16 %v710
        %v1484 = vunpack.c.l.b16 %v711
        %v1485 = vunpack.c.h.b16 %v711
        %v1486 = vunpack.c.l.b16 %v712
        %v1487 = vunpack.c.h.b16 %v712
        %v1488 = vunpack.c.l.b16 %v713
        %v1489 = vunpack.c.h.b16 %v713
        %v1490 = vunpack.c.l.b16 %v714
        %v1491 = vunpack.c.h.b16 %v714
        %v1492 = vunpack.c.l.b16 %v715
        %v1493 = vunpack.c.h.b16 %v715
        %v1494 = vunpack.c.l.b16 %v716
        %v1495 = vunpack.c.h.b16 %v716
        %v1496 = vunpack.c.l.b16 %v717
        %v1497 = vunpack.c.h.b16 %v717
        %v1498 = vunpack.c.l.b16 %v718
        %v1499 = vunpack.c.h.b16 %v718
        %v1500 = vunpack.c.l.b16 %v719
        %v1501 = vunpack.c.h.b16 %v719
        %v1502 = vpack.c.b16 %v998, %v990
        %v1503 = vpack.c.b16 %v999, %v991
        %v1504 = vpack.c.b16 %v1000, %v992
        %v1505 = vpack.c.b16 %v1001, %v993
        %v1506 = vpack.c.b16 %v1002, %v994
        %v1507 = vpack.c.b16 %v1003, %v995
        %v1508 = vpack.c.b16 %v1004, %v996
        %v1509 = vpack.c.b16 %v1005, %v997
        %v1510 = vpack.c.b16 %v1014, %v1006
        %v1511 = vpack.c.b16 %v1015, %v1007
        %v1512 = vpack.c.b16 %v1016, %v1008
        %v1513 = vpack.c.b16 %v1017, %v1009
        %v1514 = vpack.c.b16 %v1018, %v1010
        %v1515 = vpack.c.b16 %v1019, %v1011
        %v1516 = vpack.c.b16 %v1020, %v1012
        %v1517 = vpack.c.b16 %v1021, %v1013
        %v1518 = vpack.c.b16 %v1030, %v1022
        %v1519 = vpack.c.b16 %v1031, %v1023
        %v1520 = vpack.c.b16 %v1032, %v1024
        %v1521 = vpack.c.b16 %v1033, %v1025
        %v1522 = vpack.c.b16 %v1034, %v1026
        %v1523 = vpack.c.b16 %v1035, %v1027
        %v1524 = vpack.c.b16 %v1036, %v1028
        %v1525 = vpack.c.b16 %v1037, %v1029
        %v1526 = vpack.c.b16 %v1046, %v1038
        %v1527 = vpack.c.b16 %v1047, %v1039
        %v1528 = vpack.c.b16 %v1048, %v1040
        %v1529 = vpack.c.b16 %v1049, %v1041
        %v1530 = vpack.c.b16 %v1050, %v1042
        %v1531 = vpack.c.b16 %v1051, %v1043
        %v1532 = vpack.c.b16 %v1052, %v1044
        %v1533 = vpack.c.b16 %v1053, %v1045
        %v1534 = vpack.c.b16 %v1062, %v1054
        %v1535 = vpack.c.b16 %v1063, %v1055
        %v1536 = vpack.c.b16 %v1064, %v1056
        %v1537 = vpack.c.b16 %v1065, %v1057
        %v1538 = vpack.c.b16 %v1066, %v1058
        %v1539 = vpack.c.b16 %v1067, %v1059
        %v1540 = vpack.c.b16 %v1068, %v1060
        %v1541 = vpack.c.b16 %v1069, %v1061
        %v1542 = vpack.c.b16 %v1078, %v1070
        %v1543 = vpack.c.b16 %v1079, %v1071
        %v1544 = vpack.c.b16 %v1080, %v1072
        %v1545 = vpack.c.b16 %v1081, %v1073
        %v1546 = vpack.c.b16 %v1082, %v1074
        %v1547 = vpack.c.b16 %v1083, %v1075
        %v1548 = vpack.c.b16 %v1084, %v1076
        %v1549 = vpack.c.b16 %v1085, %v1077
        %v1550 = vpack.c.b16 %v1094, %v1086
        %v1551 = vpack.c.b16 %v1095, %v1087
        %v1552 = vpack.c.b16 %v1096, %v1088
        %v1553 = vpack.c.b16 %v1097, %v1089
        %v1554 = vpack.c.b16 %v1098, %v1090
        %v1555 = vpack.c.b16 %v1099, %v1091
        %v1556 = vpack.c.b16 %v1100, %v1092
        %v1557 = vpack.c.b16 %v1101, %v1093
        %v1558 = vpack.c.b16 %v1110, %v1102
        %v1559 = vpack.c.b16 %v1111, %v1103
        %v1560 = vpack.c.b16 %v1112, %v1104
        %v1561 = vpack.c.b16 %v1113, %v1105
        %v1562 = vpack.c.b16 %v1114, %v1106
        %v1563 = vpack.c.b16 %v1115, %v1107
        %v1564 = vpack.c.b16 %v1116, %v1108
        %v1565 = vpack.c.b16 %v1117, %v1109
        %v1566 = vpack.c.b16 %v1126, %v1118
        %v1567 = vpack.c.b16 %v1127, %v1119
        %v1568 = vpack.c.b16 %v1128, %v1120
        %v1569 = vpack.c.b16 %v1129, %v1121
        %v1570 = vpack.c.b16 %v1130, %v1122
        %v1571 = vpack.c.b16 %v1131, %v1123
        %v1572 = vpack.c.b16 %v1132, %v1124
        %v1573 = vpack.c.b16 %v1133, %v1125
        %v1574 = vpack.c.b16 %v1142, %v1134
        %v1575 = vpack.c.b16 %v1143, %v1135
        %v1576 = vpack.c.b16 %v1144, %v1136
        %v1577 = vpack.c.b16 %v1145, %v1137
        %v1578 = vpack.c.b16 %v1146, %v1138
        %v1579 = vpack.c.b16 %v1147, %v1139
        %v1580 = vpack.c.b16 %v1148, %v1140
        %v1581 = vpack.c.b16 %v1149, %v1141
        %v1582 = vpack.c.b16 %v1158, %v1150
        %v1583 = vpack.c.b16 %v1159, %v1151
        %v1584 = vpack.c.b16 %v1160, %v1152
        %v1585 = vpack.c.b16 %v1161, %v1153
        %v1586 = vpack.c.b16 %v1162, %v1154
        %v1587 = vpack.c.b16 %v1163, %v1155
        %v1588 = vpack.c.b16 %v1164, %v1156
        %v1589 = vpack.c.b16 %v1165, %v1157
        %v1590 = vpack.c.b16 %v1174, %v1166
        %v1591 = vpack.c.b16 %v1175, %v1167
        %v1592 = vpack.c.b16 %v1176, %v1168
        %v1593 = vpack.c.b16 %v1177, %v1169
        %v1594 = vpack.c.b16 %v1178, %v1170
        %v1595 = vpack.c.b16 %v1179, %v1171
        %v1596 = vpack.c.b16 %v1180, %v1172
        %v1597 = vpack.c.b16 %v1181, %v1173
        %v1598 = vpack.c.b16 %v1190, %v1182
        %v1599 = vpack.c.b16 %v1191, %v1183
        %v1600 = vpack.c.b16 %v1192, %v1184
        %v1601 = vpack.c.b16 %v1193, %v1185
        %v1602 = vpack.c.b16 %v1194, %v1186
        %v1603 = vpack.c.b16 %v1195, %v1187
        %v1604 = vpack.c.b16 %v1196, %v1188
        %v1605 = vpack.c.b16 %v1197, %v1189
        %v1606 = vpack.c.b16 %v1206, %v1198
        %v1607 = vpack.c.b16 %v1207, %v1199
        %v1608 = vpack.c.b16 %v1208, %v1200
        %v1609 = vpack.c.b16 %v1209, %v1201
        %v1610 = vpack.c.b16 %v1210, %v1202
        %v1611 = vpack.c.b16 %v1211, %v1203
        %v1612 = vpack.c.b16 %v1212, %v1204
        %v1613 = vpack.c.b16 %v1213, %v1205
        %v1614 = vpack.c.b16 %v1222, %v1214
        %v1615 = vpack.c.b16 %v1223, %v1215
        %v1616 = vpack.c.b16 %v1224, %v1216
        %v1617 = vpack.c.b16 %v1225, %v1217
        %v1618 = vpack.c.b16 %v1226, %v1218
        %v1619 = vpack.c.b16 %v1227, %v1219
        %v1620 = vpack.c.b16 %v1228, %v1220
        %v1621 = vpack.c.b16 %v1229, %v1221
        %v1622 = vpack.c.b16 %v1238, %v1230
        %v1623 = vpack.c.b16 %v1239, %v1231
        %v1624 = vpack.c.b16 %v1240, %v1232
        %v1625 = vpack.c.b16 %v1241, %v1233
        %v1626 = vpack.c.b16 %v1242, %v1234
        %v1627 = vpack.c.b16 %v1243, %v1235
        %v1628 = vpack.c.b16 %v1244, %v1236
        %v1629 = vpack.c.b16 %v1245, %v1237
        %v1630 = vpack.c.b16 %v1254, %v1246
        %v1631 = vpack.c.b16 %v1255, %v1247
        %v1632 = vpack.c.b16 %v1256, %v1248
        %v1633 = vpack.c.b16 %v1257, %v1249
        %v1634 = vpack.c.b16 %v1258, %v1250
        %v1635 = vpack.c.b16 %v1259, %v1251
        %v1636 = vpack.c.b16 %v1260, %v1252
        %v1637 = vpack.c.b16 %v1261, %v1253
        %v1638 = vpack.c.b16 %v1270, %v1262
        %v1639 = vpack.c.b16 %v1271, %v1263
        %v1640 = vpack.c.b16 %v1272, %v1264
        %v1641 = vpack.c.b16 %v1273, %v1265
        %v1642 = vpack.c.b16 %v1274, %v1266
        %v1643 = vpack.c.b16 %v1275, %v1267
        %v1644 = vpack.c.b16 %v1276, %v1268
        %v1645 = vpack.c.b16 %v1277, %v1269
        %v1646 = vpack.c.b16 %v1286, %v1278
        %v1647 = vpack.c.b16 %v1287, %v1279
        %v1648 = vpack.c.b16 %v1288, %v1280
        %v1649 = vpack.c.b16 %v1289, %v1281
        %v1650 = vpack.c.b16 %v1290, %v1282
        %v1651 = vpack.c.b16 %v1291, %v1283
        %v1652 = vpack.c.b16 %v1292, %v1284
        %v1653 = vpack.c.b16 %v1293, %v1285
        %v1654 = vpack.c.b16 %v1302, %v1294
        %v1655 = vpack.c.b16 %v1303, %v1295
        %v1656 = vpack.c.b16 %v1304, %v1296
        %v1657 = vpack.c.b16 %v1305, %v1297
        %v1658 = vpack.c.b16 %v1306, %v1298
        %v1659 = vpack.c.b16 %v1307, %v1299
        %v1660 = vpack.c.b16 %v1308, %v1300
        %v1661 = vpack.c.b16 %v1309, %v1301
        %v1662 = vpack.c.b16 %v1318, %v1310
        %v1663 = vpack.c.b16 %v1319, %v1311
        %v1664 = vpack.c.b16 %v1320, %v1312
        %v1665 = vpack.c.b16 %v1321, %v1313
        %v1666 = vpack.c.b16 %v1322, %v1314
        %v1667 = vpack.c.b16 %v1323, %v1315
        %v1668 = vpack.c.b16 %v1324, %v1316
        %v1669 = vpack.c.b16 %v1325, %v1317
        %v1670 = vpack.c.b16 %v1334, %v1326
        %v1671 = vpack.c.b16 %v1335, %v1327
        %v1672 = vpack.c.b16 %v1336, %v1328
        %v1673 = vpack.c.b16 %v1337, %v1329
        %v1674 = vpack.c.b16 %v1338, %v1330
        %v1675 = vpack.c.b16 %v1339, %v1331
        %v1676 = vpack.c.b16 %v1340, %v1332
        %v1677 = vpack.c.b16 %v1341, %v1333
        %v1678 = vpack.c.b16 %v1350, %v1342
        %v1679 = vpack.c.b16 %v1351, %v1343
        %v1680 = vpack.c.b16 %v1352, %v1344
        %v1681 = vpack.c.b16 %v1353, %v1345
        %v1682 = vpack.c.b16 %v1354, %v1346
        %v1683 = vpack.c.b16 %v1355, %v1347
        %v1684 = vpack.c.b16 %v1356, %v1348
        %v1685 = vpack.c.b16 %v1357, %v1349
        %v1686 = vpack.c.b16 %v1366, %v1358
        %v1687 = vpack.c.b16 %v1367, %v1359
        %v1688 = vpack.c.b16 %v1368, %v1360
        %v1689 = vpack.c.b16 %v1369, %v1361
        %v1690 = vpack.c.b16 %v1370, %v1362
        %v1691 = vpack.c.b16 %v1371, %v1363
        %v1692 = vpack.c.b16 %v1372, %v1364
        %v1693 = vpack.c.b16 %v1373, %v1365
        %v1694 = vpack.c.b16 %v1382, %v1374
        %v1695 = vpack.c.b16 %v1383, %v1375
        %v1696 = vpack.c.b16 %v1384, %v1376
        %v1697 = vpack.c.b16 %v1385, %v1377
        %v1698 = vpack.c.b16 %v1386, %v1378
        %v1699 = vpack.c.b16 %v1387, %v1379
        %v1700 = vpack.c.b16 %v1388, %v1380
        %v1701 = vpack.c.b16 %v1389, %v1381
        %v1702 = vpack.c.b16 %v1398, %v1390
        %v1703 = vpack.c.b16 %v1399, %v1391
        %v1704 = vpack.c.b16 %v1400, %v1392
        %v1705 = vpack.c.b16 %v1401, %v1393
        %v1706 = vpack.c.b16 %v1402, %v1394
        %v1707 = vpack.c.b16 %v1403, %v1395
        %v1708 = vpack.c.b16 %v1404, %v1396
        %v1709 = vpack.c.b16 %v1405, %v1397
        %v1710 = vpack.c.b16 %v1414, %v1406
        %v1711 = vpack.c.b16 %v1415, %v1407
        %v1712 = vpack.c.b16 %v1416, %v1408
        %v1713 = vpack.c.b16 %v1417, %v1409
        %v1714 = vpack.c.b16 %v1418, %v1410
        %v1715 = vpack.c.b16 %v1419, %v1411
        %v1716 = vpack.c.b16 %v1420, %v1412
        %v1717 = vpack.c.b16 %v1421, %v1413
        %v1718 = vpack.c.b16 %v1430, %v1422
        %v1719 = vpack.c.b16 %v1431, %v1423
        %v1720 = vpack.c.b16 %v1432, %v1424
        %v1721 = vpack.c.b16 %v1433, %v1425
        %v1722 = vpack.c.b16 %v1434, %v1426
        %v1723 = vpack.c.b16 %v1435, %v1427
        %v1724 = vpack.c.b16 %v1436, %v1428
        %v1725 = vpack.c.b16 %v1437, %v1429
        %v1726 = vpack.c.b16 %v1446, %v1438
        %v1727 = vpack.c.b16 %v1447, %v1439
        %v1728 = vpack.c.b16 %v1448, %v1440
        %v1729 = vpack.c.b16 %v1449, %v1441
        %v1730 = vpack.c.b16 %v1450, %v1442
        %v1731 = vpack.c.b16 %v1451, %v1443
        %v1732 = vpack.c.b16 %v1452, %v1444
        %v1733 = vpack.c.b16 %v1453, %v1445
        %v1734 = vpack.c.b16 %v1462, %v1454
        %v1735 = vpack.c.b16 %v1463, %v1455
        %v1736 = vpack.c.b16 %v1464, %v1456
        %v1737 = vpack.c.b16 %v1465, %v1457
        %v1738 = vpack.c.b16 %v1466, %v1458
        %v1739 = vpack.c.b16 %v1467, %v1459
        %v1740 = vpack.c.b16 %v1468, %v1460
        %v1741 = vpack.c.b16 %v1469, %v1461
        %v1742 = vpack.c.b16 %v1478, %v1470
        %v1743 = vpack.c.b16 %v1479, %v1471
        %v1744 = vpack.c.b16 %v1480, %v1472
        %v1745 = vpack.c.b16 %v1481, %v1473
        %v1746 = vpack.c.b16 %v1482, %v1474
        %v1747 = vpack.c.b16 %v1483, %v1475
        %v1748 = vpack.c.b16 %v1484, %v1476
        %v1749 = vpack.c.b16 %v1485, %v1477
        %v1750 = vpack.c.b16 %v1494, %v1486
        %v1751 = vpack.c.b16 %v1495, %v1487
        %v1752 = vpack.c.b16 %v1496, %v1488
        %v1753 = vpack.c.b16 %v1497, %v1489
        %v1754 = vpack.c.b16 %v1498, %v1490
        %v1755 = vpack.c.b16 %v1499, %v1491
        %v1756 = vpack.c.b16 %v1500, %v1492
        %v1757 = vpack.c.b16 %v1501, %v1493
        %2014 = vmatprep.subr.bf16.mxu0 %v1503
        %2015 = vmatpush1.bf16.msra.mxu0 %v1502
        %2016 = vmatprep.subr.bf16.mxu0 %v1511
        %2017 = vmatpush1.bf16.msra.mxu0 %v1510
        %2018 = vmatprep.subr.bf16.mxu0 %v1519
        %2019 = vmatpush1.bf16.msra.mxu0 %v1518
        %2020 = vmatprep.subr.bf16.mxu0 %v1527
        %2021 = vmatpush1.bf16.msra.mxu0 %v1526
        %2022 = vmatprep.subr.bf16.mxu0 %v1535
        %2023 = vmatpush1.bf16.msra.mxu0 %v1534
        %2024 = vmatprep.subr.bf16.mxu0 %v1543
        %2025 = vmatpush1.bf16.msra.mxu0 %v1542
        %2026 = vmatprep.subr.bf16.mxu0 %v1551
        %2027 = vmatpush1.bf16.msra.mxu0 %v1550
        %2028 = vmatprep.subr.bf16.mxu0 %v1559
        %2029 = vmatpush1.bf16.msra.mxu0 %v1558
        %2030 = vmatprep.subr.bf16.mxu0 %v1567
        %2031 = vmatpush1.bf16.msra.mxu0 %v1566
        %2032 = vmatprep.subr.bf16.mxu0 %v1575
        %2033 = vmatpush1.bf16.msra.mxu0 %v1574
        %2034 = vmatprep.subr.bf16.mxu0 %v1583
        %2035 = vmatpush1.bf16.msra.mxu0 %v1582
        %2036 = vmatprep.subr.bf16.mxu0 %v1591
        %2037 = vmatpush1.bf16.msra.mxu0 %v1590
        %2038 = vmatprep.subr.bf16.mxu0 %v1599
        %2039 = vmatpush1.bf16.msra.mxu0 %v1598
        %2040 = vmatprep.subr.bf16.mxu0 %v1607
        %2041 = vmatpush1.bf16.msra.mxu0 %v1606
        %2042 = vmatprep.subr.bf16.mxu0 %v1615
        %2043 = vmatpush1.bf16.msra.mxu0 %v1614
        %2044 = vmatprep.subr.bf16.mxu0 %v1623
        %2045 = vmatpush1.bf16.msra.mxu0 %v1622
        %2046 = vmatprep.mubr.bf16.mxu0 %v727
        %2047 = vmatmul.mubr.bf16.gmra.mrb[0].mxu0 %v726
        %v2048 = vpop.f32.mrb[0].mxu0
        %v2049 = vadd.f32 0.0, %v2048
        %v2050 = vpop.f32.mrb[0].mxu0
        %v2051 = vadd.f32 0.0, %v2050
        %v2052 = vpop.f32.mrb[0].mxu0
        %v2053 = vpop.f32.mrb[0].mxu0
        %2054 = vdwg.mxu0
        %2055 = vmatprep.subr.bf16.mxu0 %v1631
        %2056 = vmatpush1.bf16.msra.mxu0 %v1630
        %2057 = vmatprep.subr.bf16.mxu0 %v1639
        %2058 = vmatpush1.bf16.msra.mxu0 %v1638
        %2059 = vmatprep.subr.bf16.mxu0 %v1647
        %2060 = vmatpush1.bf16.msra.mxu0 %v1646
        %2061 = vmatprep.subr.bf16.mxu0 %v1655
        %2062 = vmatpush1.bf16.msra.mxu0 %v1654
        %2063 = vmatprep.subr.bf16.mxu0 %v1663
        %2064 = vmatpush1.bf16.msra.mxu0 %v1662
        %2065 = vmatprep.subr.bf16.mxu0 %v1671
        %2066 = vmatpush1.bf16.msra.mxu0 %v1670
        %2067 = vmatprep.subr.bf16.mxu0 %v1679
        %2068 = vmatpush1.bf16.msra.mxu0 %v1678
        %2069 = vmatprep.subr.bf16.mxu0 %v1687
        %2070 = vmatpush1.bf16.msra.mxu0 %v1686
        %2071 = vmatprep.subr.bf16.mxu0 %v1695
        %2072 = vmatpush1.bf16.msra.mxu0 %v1694
        %2073 = vmatprep.subr.bf16.mxu0 %v1703
        %2074 = vmatpush1.bf16.msra.mxu0 %v1702
        %2075 = vmatprep.subr.bf16.mxu0 %v1711
        %2076 = vmatpush1.bf16.msra.mxu0 %v1710
        %2077 = vmatprep.subr.bf16.mxu0 %v1719
        %2078 = vmatpush1.bf16.msra.mxu0 %v1718
        %2079 = vmatprep.subr.bf16.mxu0 %v1727
        %2080 = vmatpush1.bf16.msra.mxu0 %v1726
        %2081 = vmatprep.subr.bf16.mxu0 %v1735
        %2082 = vmatpush1.bf16.msra.mxu0 %v1734
        %2083 = vmatprep.subr.bf16.mxu0 %v1743
        %2084 = vmatpush1.bf16.msra.mxu0 %v1742
        %2085 = vmatprep.subr.bf16.mxu0 %v1751
        %2086 = vmatpush1.bf16.msra.mxu0 %v1750
        %2087 = vmatprep.mubr.bf16.mxu0 %v729
        %2088 = vmatmul.mubr.bf16.gmra.mrb[0].mxu0 %v728
        %v2089 = vpop.f32.mrb[0].mxu0
        %v2090 = vadd.f32 %v2049, %v2089
        %v2091 = vpop.f32.mrb[0].mxu0
        %v2092 = vadd.f32 %v2051, %v2091
        %v2093 = vpop.f32.mrb[0].mxu0
        %v2094 = vpop.f32.mrb[0].mxu0
        %2095 = vdwg.mxu0
        %2096 = vmatprep.subr.bf16.mxu0 %v1505
        %2097 = vmatpush1.bf16.msra.mxu0 %v1504
        %2098 = vmatprep.subr.bf16.mxu0 %v1513
        %2099 = vmatpush1.bf16.msra.mxu0 %v1512
        %2100 = vmatprep.subr.bf16.mxu0 %v1521
        %2101 = vmatpush1.bf16.msra.mxu0 %v1520
        %2102 = vmatprep.subr.bf16.mxu0 %v1529
        %2103 = vmatpush1.bf16.msra.mxu0 %v1528
        %2104 = vmatprep.subr.bf16.mxu0 %v1537
        %2105 = vmatpush1.bf16.msra.mxu0 %v1536
        %2106 = vmatprep.subr.bf16.mxu0 %v1545
        %2107 = vmatpush1.bf16.msra.mxu0 %v1544
        %2108 = vmatprep.subr.bf16.mxu0 %v1553
        %2109 = vmatpush1.bf16.msra.mxu0 %v1552
        %2110 = vmatprep.subr.bf16.mxu0 %v1561
        %2111 = vmatpush1.bf16.msra.mxu0 %v1560
        %2112 = vmatprep.subr.bf16.mxu0 %v1569
        %2113 = vmatpush1.bf16.msra.mxu0 %v1568
        %2114 = vmatprep.subr.bf16.mxu0 %v1577
        %2115 = vmatpush1.bf16.msra.mxu0 %v1576
        %2116 = vmatprep.subr.bf16.mxu0 %v1585
        %2117 = vmatpush1.bf16.msra.mxu0 %v1584
        %2118 = vmatprep.subr.bf16.mxu0 %v1593
        %2119 = vmatpush1.bf16.msra.mxu0 %v1592
        %2120 = vmatprep.subr.bf16.mxu0 %v1601
        %2121 = vmatpush1.bf16.msra.mxu0 %v1600
        %2122 = vmatprep.subr.bf16.mxu0 %v1609
        %2123 = vmatpush1.bf16.msra.mxu0 %v1608
        %2124 = vmatprep.subr.bf16.mxu0 %v1617
        %2125 = vmatpush1.bf16.msra.mxu0 %v1616
        %2126 = vmatprep.subr.bf16.mxu0 %v1625
        %2127 = vmatpush1.bf16.msra.mxu0 %v1624
        %2128 = vmatprep.mubr.bf16.mxu0 %v727
        %2129 = vmatmul.mubr.bf16.gmra.mrb[0].mxu0 %v726
        %v2130 = vpop.f32.mrb[0].mxu0
        %v2131 = vadd.f32 0.0, %v2130
        %v2132 = vpop.f32.mrb[0].mxu0
        %v2133 = vadd.f32 0.0, %v2132
        %v2134 = vpop.f32.mrb[0].mxu0
        %v2135 = vpop.f32.mrb[0].mxu0
        %2136 = vdwg.mxu0
        %2137 = vmatprep.subr.bf16.mxu0 %v1633
        %2138 = vmatpush1.bf16.msra.mxu0 %v1632
        %2139 = vmatprep.subr.bf16.mxu0 %v1641
        %2140 = vmatpush1.bf16.msra.mxu0 %v1640
        %2141 = vmatprep.subr.bf16.mxu0 %v1649
        %2142 = vmatpush1.bf16.msra.mxu0 %v1648
        %2143 = vmatprep.subr.bf16.mxu0 %v1657
        %2144 = vmatpush1.bf16.msra.mxu0 %v1656
        %2145 = vmatprep.subr.bf16.mxu0 %v1665
        %2146 = vmatpush1.bf16.msra.mxu0 %v1664
        %2147 = vmatprep.subr.bf16.mxu0 %v1673
        %2148 = vmatpush1.bf16.msra.mxu0 %v1672
        %2149 = vmatprep.subr.bf16.mxu0 %v1681
        %2150 = vmatpush1.bf16.msra.mxu0 %v1680
        %2151 = vmatprep.subr.bf16.mxu0 %v1689
        %2152 = vmatpush1.bf16.msra.mxu0 %v1688
        %2153 = vmatprep.subr.bf16.mxu0 %v1697
        %2154 = vmatpush1.bf16.msra.mxu0 %v1696
        %2155 = vmatprep.subr.bf16.mxu0 %v1705
        %2156 = vmatpush1.bf16.msra.mxu0 %v1704
        %2157 = vmatprep.subr.bf16.mxu0 %v1713
        %2158 = vmatpush1.bf16.msra.mxu0 %v1712
        %2159 = vmatprep.subr.bf16.mxu0 %v1721
        %2160 = vmatpush1.bf16.msra.mxu0 %v1720
        %2161 = vmatprep.subr.bf16.mxu0 %v1729
        %2162 = vmatpush1.bf16.msra.mxu0 %v1728
        %2163 = vmatprep.subr.bf16.mxu0 %v1737
        %2164 = vmatpush1.bf16.msra.mxu0 %v1736
        %2165 = vmatprep.subr.bf16.mxu0 %v1745
        %2166 = vmatpush1.bf16.msra.mxu0 %v1744
        %2167 = vmatprep.subr.bf16.mxu0 %v1753
        %2168 = vmatpush1.bf16.msra.mxu0 %v1752
        %2169 = vmatprep.mubr.bf16.mxu0 %v729
        %2170 = vmatmul.mubr.bf16.gmra.mrb[0].mxu0 %v728
        %v2171 = vpop.f32.mrb[0].mxu0
        %v2172 = vadd.f32 %v2131, %v2171
        %v2173 = vpop.f32.mrb[0].mxu0
        %v2174 = vadd.f32 %v2133, %v2173
        %v2175 = vpop.f32.mrb[0].mxu0
        %v2176 = vpop.f32.mrb[0].mxu0
        %2177 = vdwg.mxu0
        %2178 = vmatprep.subr.bf16.mxu0 %v1507
        %2179 = vmatpush1.bf16.msra.mxu0 %v1506
        %2180 = vmatprep.subr.bf16.mxu0 %v1515
        %2181 = vmatpush1.bf16.msra.mxu0 %v1514
        %2182 = vmatprep.subr.bf16.mxu0 %v1523
        %2183 = vmatpush1.bf16.msra.mxu0 %v1522
        %2184 = vmatprep.subr.bf16.mxu0 %v1531
        %2185 = vmatpush1.bf16.msra.mxu0 %v1530
        %2186 = vmatprep.subr.bf16.mxu0 %v1539
        %2187 = vmatpush1.bf16.msra.mxu0 %v1538
        %2188 = vmatprep.subr.bf16.mxu0 %v1547
        %2189 = vmatpush1.bf16.msra.mxu0 %v1546
        %2190 = vmatprep.subr.bf16.mxu0 %v1555
        %2191 = vmatpush1.bf16.msra.mxu0 %v1554
        %2192 = vmatprep.subr.bf16.mxu0 %v1563
        %2193 = vmatpush1.bf16.msra.mxu0 %v1562
        %2194 = vmatprep.subr.bf16.mxu0 %v1571
        %2195 = vmatpush1.bf16.msra.mxu0 %v1570
        %2196 = vmatprep.subr.bf16.mxu0 %v1579
        %2197 = vmatpush1.bf16.msra.mxu0 %v1578
        %2198 = vmatprep.subr.bf16.mxu0 %v1587
        %2199 = vmatpush1.bf16.msra.mxu0 %v1586
        %2200 = vmatprep.subr.bf16.mxu0 %v1595
        %2201 = vmatpush1.bf16.msra.mxu0 %v1594
        %2202 = vmatprep.subr.bf16.mxu0 %v1603
        %2203 = vmatpush1.bf16.msra.mxu0 %v1602
        %2204 = vmatprep.subr.bf16.mxu0 %v1611
        %2205 = vmatpush1.bf16.msra.mxu0 %v1610
        %2206 = vmatprep.subr.bf16.mxu0 %v1619
        %2207 = vmatpush1.bf16.msra.mxu0 %v1618
        %2208 = vmatprep.subr.bf16.mxu0 %v1627
        %2209 = vmatpush1.bf16.msra.mxu0 %v1626
        %2210 = vmatprep.mubr.bf16.mxu0 %v727
        %2211 = vmatmul.mubr.bf16.gmra.mrb[0].mxu0 %v726
        %v2212 = vpop.f32.mrb[0].mxu0
        %v2213 = vadd.f32 0.0, %v2212
        %v2214 = vpop.f32.mrb[0].mxu0
        %v2215 = vadd.f32 0.0, %v2214
        %v2216 = vpop.f32.mrb[0].mxu0
        %v2217 = vpop.f32.mrb[0].mxu0
        %2218 = vdwg.mxu0
        %2219 = vmatprep.subr.bf16.mxu0 %v1635
        %2220 = vmatpush1.bf16.msra.mxu0 %v1634
        %2221 = vmatprep.subr.bf16.mxu0 %v1643
        %2222 = vmatpush1.bf16.msra.mxu0 %v1642
        %2223 = vmatprep.subr.bf16.mxu0 %v1651
        %2224 = vmatpush1.bf16.msra.mxu0 %v1650
        %2225 = vmatprep.subr.bf16.mxu0 %v1659
        %2226 = vmatpush1.bf16.msra.mxu0 %v1658
        %2227 = vmatprep.subr.bf16.mxu0 %v1667
        %2228 = vmatpush1.bf16.msra.mxu0 %v1666
        %2229 = vmatprep.subr.bf16.mxu0 %v1675
        %2230 = vmatpush1.bf16.msra.mxu0 %v1674
        %2231 = vmatprep.subr.bf16.mxu0 %v1683
        %2232 = vmatpush1.bf16.msra.mxu0 %v1682
        %2233 = vmatprep.subr.bf16.mxu0 %v1691
        %2234 = vmatpush1.bf16.msra.mxu0 %v1690
        %2235 = vmatprep.subr.bf16.mxu0 %v1699
        %2236 = vmatpush1.bf16.msra.mxu0 %v1698
        %2237 = vmatprep.subr.bf16.mxu0 %v1707
        %2238 = vmatpush1.bf16.msra.mxu0 %v1706
        %2239 = vmatprep.subr.bf16.mxu0 %v1715
        %2240 = vmatpush1.bf16.msra.mxu0 %v1714
        %2241 = vmatprep.subr.bf16.mxu0 %v1723
        %2242 = vmatpush1.bf16.msra.mxu0 %v1722
        %2243 = vmatprep.subr.bf16.mxu0 %v1731
        %2244 = vmatpush1.bf16.msra.mxu0 %v1730
        %2245 = vmatprep.subr.bf16.mxu0 %v1739
        %2246 = vmatpush1.bf16.msra.mxu0 %v1738
        %2247 = vmatprep.subr.bf16.mxu0 %v1747
        %2248 = vmatpush1.bf16.msra.mxu0 %v1746
        %2249 = vmatprep.subr.bf16.mxu0 %v1755
        %2250 = vmatpush1.bf16.msra.mxu0 %v1754
        %2251 = vmatprep.mubr.bf16.mxu0 %v729
        %2252 = vmatmul.mubr.bf16.gmra.mrb[0].mxu0 %v728
        %v2253 = vpop.f32.mrb[0].mxu0
        %v2254 = vadd.f32 %v2213, %v2253
        %v2255 = vpop.f32.mrb[0].mxu0
        %v2256 = vadd.f32 %v2215, %v2255
        %v2257 = vpop.f32.mrb[0].mxu0
        %v2258 = vpop.f32.mrb[0].mxu0
        %2259 = vdwg.mxu0
        %2260 = vmatprep.subr.bf16.mxu0 %v1509
        %2261 = vmatpush1.bf16.msra.mxu0 %v1508
        %2262 = vmatprep.subr.bf16.mxu0 %v1517
        %2263 = vmatpush1.bf16.msra.mxu0 %v1516
        %2264 = vmatprep.subr.bf16.mxu0 %v1525
        %2265 = vmatpush1.bf16.msra.mxu0 %v1524
        %2266 = vmatprep.subr.bf16.mxu0 %v1533
        %2267 = vmatpush1.bf16.msra.mxu0 %v1532
        %2268 = vmatprep.subr.bf16.mxu0 %v1541
        %2269 = vmatpush1.bf16.msra.mxu0 %v1540
        %2270 = vmatprep.subr.bf16.mxu0 %v1549
        %2271 = vmatpush1.bf16.msra.mxu0 %v1548
        %2272 = vmatprep.subr.bf16.mxu0 %v1557
        %2273 = vmatpush1.bf16.msra.mxu0 %v1556
        %2274 = vmatprep.subr.bf16.mxu0 %v1565
        %2275 = vmatpush1.bf16.msra.mxu0 %v1564
        %2276 = vmatprep.subr.bf16.mxu0 %v1573
        %2277 = vmatpush1.bf16.msra.mxu0 %v1572
        %2278 = vmatprep.subr.bf16.mxu0 %v1581
        %2279 = vmatpush1.bf16.msra.mxu0 %v1580
        %2280 = vmatprep.subr.bf16.mxu0 %v1589
        %2281 = vmatpush1.bf16.msra.mxu0 %v1588
        %2282 = vmatprep.subr.bf16.mxu0 %v1597
        %2283 = vmatpush1.bf16.msra.mxu0 %v1596
        %2284 = vmatprep.subr.bf16.mxu0 %v1605
        %2285 = vmatpush1.bf16.msra.mxu0 %v1604
        %2286 = vmatprep.subr.bf16.mxu0 %v1613
        %2287 = vmatpush1.bf16.msra.mxu0 %v1612
        %2288 = vmatprep.subr.bf16.mxu0 %v1621
        %2289 = vmatpush1.bf16.msra.mxu0 %v1620
        %2290 = vmatprep.subr.bf16.mxu0 %v1629
        %2291 = vmatpush1.bf16.msra.mxu0 %v1628
        %2292 = vmatprep.mubr.bf16.mxu0 %v727
        %2293 = vmatmul.mubr.bf16.gmra.mrb[0].mxu0 %v726
        %v2294 = vpop.f32.mrb[0].mxu0
        %v2295 = vadd.f32 0.0, %v2294
        %v2296 = vpop.f32.mrb[0].mxu0
        %v2297 = vadd.f32 0.0, %v2296
        %v2298 = vpop.f32.mrb[0].mxu0
        %v2299 = vpop.f32.mrb[0].mxu0
        %2300 = vdwg.mxu0
        %2301 = vmatprep.subr.bf16.mxu0 %v1637
        %2302 = vmatpush1.bf16.msra.mxu0 %v1636
        %2303 = vmatprep.subr.bf16.mxu0 %v1645
        %2304 = vmatpush1.bf16.msra.mxu0 %v1644
        %2305 = vmatprep.subr.bf16.mxu0 %v1653
        %2306 = vmatpush1.bf16.msra.mxu0 %v1652
        %2307 = vmatprep.subr.bf16.mxu0 %v1661
        %2308 = vmatpush1.bf16.msra.mxu0 %v1660
        %2309 = vmatprep.subr.bf16.mxu0 %v1669
        %2310 = vmatpush1.bf16.msra.mxu0 %v1668
        %2311 = vmatprep.subr.bf16.mxu0 %v1677
        %2312 = vmatpush1.bf16.msra.mxu0 %v1676
        %2313 = vmatprep.subr.bf16.mxu0 %v1685
        %2314 = vmatpush1.bf16.msra.mxu0 %v1684
        %2315 = vmatprep.subr.bf16.mxu0 %v1693
        %2316 = vmatpush1.bf16.msra.mxu0 %v1692
        %2317 = vmatprep.subr.bf16.mxu0 %v1701
        %2318 = vmatpush1.bf16.msra.mxu0 %v1700
        %2319 = vmatprep.subr.bf16.mxu0 %v1709
        %2320 = vmatpush1.bf16.msra.mxu0 %v1708
        %2321 = vmatprep.subr.bf16.mxu0 %v1717
        %2322 = vmatpush1.bf16.msra.mxu0 %v1716
        %2323 = vmatprep.subr.bf16.mxu0 %v1725
        %2324 = vmatpush1.bf16.msra.mxu0 %v1724
        %2325 = vmatprep.subr.bf16.mxu0 %v1733
        %2326 = vmatpush1.bf16.msra.mxu0 %v1732
        %2327 = vmatprep.subr.bf16.mxu0 %v1741
        %2328 = vmatpush1.bf16.msra.mxu0 %v1740
        %2329 = vmatprep.subr.bf16.mxu0 %v1749
        %2330 = vmatpush1.bf16.msra.mxu0 %v1748
        %2331 = vmatprep.subr.bf16.mxu0 %v1757
        %2332 = vmatpush1.bf16.msra.mxu0 %v1756
        %2333 = vmatprep.mubr.bf16.mxu0 %v729
        %2334 = vmatmul.mubr.bf16.gmra.mrb[0].mxu0 %v728
        %v2335 = vpop.f32.mrb[0].mxu0
        %v2336 = vadd.f32 %v2295, %v2335
        %v2337 = vpop.f32.mrb[0].mxu0
        %v2338 = vadd.f32 %v2297, %v2337
        %v2339 = vpop.f32.mrb[0].mxu0
        %v2340 = vpop.f32.mrb[0].mxu0
        %2341 = vdwg.mxu0
        %v2342 = vadd.f32 %v454, %v2090
        %v2343 = vadd.f32 %v455, %v2092
        %v2344 = vadd.f32 %v456, %v2172
        %v2345 = vadd.f32 %v457, %v2174
        %v2346 = vadd.f32 %v458, %v2254
        %v2347 = vadd.f32 %v459, %v2256
        %v2348 = vadd.f32 %v460, %v2336
        %v2349 = vadd.f32 %v461, %v2338
        %2350 = vst [vmem:[#allocation2] sm:$0xff] %v2342
        %2351 = vst [vmem:[#allocation2 + $0x8] sm:$0xff] %v2343
        %2352 = vst [vmem:[#allocation2 + $0x10] sm:$0xff] %v2344
        %2353 = vst [vmem:[#allocation2 + $0x18] sm:$0xff] %v2345
        %2354 = vst [vmem:[#allocation2 + $0x20] sm:$0xff] %v2346
        %2355 = vst [vmem:[#allocation2 + $0x28] sm:$0xff] %v2347
        %2356 = vst [vmem:[#allocation2 + $0x30] sm:$0xff] %v2348
        %2357 = vst [vmem:[#allocation2 + $0x38] sm:$0xff] %v2349
        %p2358 = scmp.eq.s32.totalorder %s34, 1
        // Predicated region
        $region85: #{tpu_custom_call.1} parent=51 // pred_check
          %p2359 = pneg %p2358
        $region86: #{tpu_custom_call.1} parent=51 // pred_check_branch
          %2361 = sbr.rel (%p2359) target = $region88
        $region87: #{tpu_custom_call.1} parent=51 // pred_region
          %v2362 = vld [vmem:[#allocation2] sm:$0xff]
          %v2363 = vld [vmem:[#allocation2 + $0x8] sm:$0xff]
          %v2364 = vld [vmem:[#allocation2 + $0x10] sm:$0xff]
          %v2365 = vld [vmem:[#allocation2 + $0x18] sm:$0xff]
          %v2366 = vld [vmem:[#allocation2 + $0x20] sm:$0xff]
          %v2367 = vld [vmem:[#allocation2 + $0x28] sm:$0xff]
          %v2368 = vld [vmem:[#allocation2 + $0x30] sm:$0xff]
          %v2369 = vld [vmem:[#allocation2 + $0x38] sm:$0xff]
          %v2370 = vld [vmem:[#allocation9] sm:$0xff]
          %v2372 = vlaneseq
          %v2373 = vshrl.u32 %v2372, 7
          %v2374 = vsub.s32 0, %v2373
          %v2375 = vrot.slane %v2370, %v2374
          %v2376 = vlaneseq
          %v2377 = vshrl.u32 %v2376, 7
          %v2378 = vsub.s32 1, %v2377
          %v2379 = vrot.slane %v2370, %v2378
          %v2380 = vlaneseq
          %v2381 = vshrl.u32 %v2380, 7
          %v2382 = vsub.s32 2, %v2381
          %v2383 = vrot.slane %v2370, %v2382
          %v2384 = vlaneseq
          %v2385 = vshrl.u32 %v2384, 7
          %v2386 = vsub.s32 3, %v2385
          %v2387 = vrot.slane %v2370, %v2386
          %v2388 = vlaneseq
          %v2389 = vshrl.u32 %v2388, 7
          %v2390 = vsub.s32 4, %v2389
          %v2391 = vrot.slane %v2370, %v2390
          %v2392 = vlaneseq
          %v2393 = vshrl.u32 %v2392, 7
          %v2394 = vsub.s32 5, %v2393
          %v2395 = vrot.slane %v2370, %v2394
          %v2396 = vlaneseq
          %v2397 = vshrl.u32 %v2396, 7
          %v2398 = vsub.s32 6, %v2397
          %v2399 = vrot.slane %v2370, %v2398
          %v2400 = vlaneseq
          %v2401 = vshrl.u32 %v2400, 7
          %v2402 = vsub.s32 7, %v2401
          %v2403 = vrot.slane %v2370, %v2402
          %v2412 = vadd.f32 %v2362, %v2375
          %v2413 = vadd.f32 %v2363, %v2379
          %v2414 = vadd.f32 %v2364, %v2383
          %v2415 = vadd.f32 %v2365, %v2387
          %v2416 = vadd.f32 %v2366, %v2391
          %v2417 = vadd.f32 %v2367, %v2395
          %v2418 = vadd.f32 %v2368, %v2399
          %v2419 = vadd.f32 %v2369, %v2403
          %v2420 = vpack.c.bf16 %v2412, %v2412
          %v2421 = vpack.c.bf16 %v2413, %v2413
          %v2422 = vpack.c.bf16 %v2414, %v2414
          %v2423 = vpack.c.bf16 %v2415, %v2415
          %v2424 = vpack.c.bf16 %v2416, %v2416
          %v2425 = vpack.c.bf16 %v2417, %v2417
          %v2426 = vpack.c.bf16 %v2418, %v2418
          %v2427 = vpack.c.bf16 %v2419, %v2419
          %v2428 = vld [vmem:[#allocation10] sm:$0xf]
          %v2429 = vld [vmem:[#allocation10 + $0x4] sm:$0xf]
          %v2430 = vld [vmem:[#allocation10 + $0x8] sm:$0xf]
          %v2431 = vld [vmem:[#allocation10 + $0xc] sm:$0xf]
          %v2432 = vld [vmem:[#allocation10 + $0x10] sm:$0xf]
          %v2433 = vld [vmem:[#allocation10 + $0x14] sm:$0xf]
          %v2434 = vld [vmem:[#allocation10 + $0x18] sm:$0xf]
          %v2435 = vld [vmem:[#allocation10 + $0x1c] sm:$0xf]
          %v2436 = vld [vmem:[#allocation10 + $0x20] sm:$0xf]
          %v2437 = vld [vmem:[#allocation10 + $0x24] sm:$0xf]
          %v2438 = vld [vmem:[#allocation10 + $0x28] sm:$0xf]
          %v2439 = vld [vmem:[#allocation10 + $0x2c] sm:$0xf]
          %v2440 = vld [vmem:[#allocation10 + $0x30] sm:$0xf]
          %v2441 = vld [vmem:[#allocation10 + $0x34] sm:$0xf]
          %v2442 = vld [vmem:[#allocation10 + $0x38] sm:$0xf]
          %v2443 = vld [vmem:[#allocation10 + $0x3c] sm:$0xf]
          %v2444 = vld [vmem:[#allocation10 + $0x40] sm:$0xf]
          %v2445 = vld [vmem:[#allocation10 + $0x44] sm:$0xf]
          %v2446 = vld [vmem:[#allocation10 + $0x48] sm:$0xf]
          %v2447 = vld [vmem:[#allocation10 + $0x4c] sm:$0xf]
          %v2448 = vld [vmem:[#allocation10 + $0x50] sm:$0xf]
          %v2449 = vld [vmem:[#allocation10 + $0x54] sm:$0xf]
          %v2450 = vld [vmem:[#allocation10 + $0x58] sm:$0xf]
          %v2451 = vld [vmem:[#allocation10 + $0x5c] sm:$0xf]
          %v2452 = vld [vmem:[#allocation10 + $0x60] sm:$0xf]
          %v2453 = vld [vmem:[#allocation10 + $0x64] sm:$0xf]
          %v2454 = vld [vmem:[#allocation10 + $0x68] sm:$0xf]
          %v2455 = vld [vmem:[#allocation10 + $0x6c] sm:$0xf]
          %v2456 = vld [vmem:[#allocation10 + $0x70] sm:$0xf]
          %v2457 = vld [vmem:[#allocation10 + $0x74] sm:$0xf]
          %v2458 = vld [vmem:[#allocation10 + $0x78] sm:$0xf]
          %v2459 = vld [vmem:[#allocation10 + $0x7c] sm:$0xf]
          %v2460 = vld [vmem:[#allocation10 + $0x80] sm:$0xf]
          %v2461 = vld [vmem:[#allocation10 + $0x84] sm:$0xf]
          %v2462 = vld [vmem:[#allocation10 + $0x88] sm:$0xf]
          %v2463 = vld [vmem:[#allocation10 + $0x8c] sm:$0xf]
          %v2464 = vld [vmem:[#allocation10 + $0x90] sm:$0xf]
          %v2465 = vld [vmem:[#allocation10 + $0x94] sm:$0xf]
          %v2466 = vld [vmem:[#allocation10 + $0x98] sm:$0xf]
          %v2467 = vld [vmem:[#allocation10 + $0x9c] sm:$0xf]
          %v2468 = vld [vmem:[#allocation10 + $0xa0] sm:$0xf]
          %v2469 = vld [vmem:[#allocation10 + $0xa4] sm:$0xf]
          %v2470 = vld [vmem:[#allocation10 + $0xa8] sm:$0xf]
          %v2471 = vld [vmem:[#allocation10 + $0xac] sm:$0xf]
          %v2472 = vld [vmem:[#allocation10 + $0xb0] sm:$0xf]
          %v2473 = vld [vmem:[#allocation10 + $0xb4] sm:$0xf]
          %v2474 = vld [vmem:[#allocation10 + $0xb8] sm:$0xf]
          %v2475 = vld [vmem:[#allocation10 + $0xbc] sm:$0xf]
          %v2476 = vld [vmem:[#allocation10 + $0xc0] sm:$0xf]
          %v2477 = vld [vmem:[#allocation10 + $0xc4] sm:$0xf]
          %v2478 = vld [vmem:[#allocation10 + $0xc8] sm:$0xf]
          %v2479 = vld [vmem:[#allocation10 + $0xcc] sm:$0xf]
          %v2480 = vld [vmem:[#allocation10 + $0xd0] sm:$0xf]
          %v2481 = vld [vmem:[#allocation10 + $0xd4] sm:$0xf]
          %v2482 = vld [vmem:[#allocation10 + $0xd8] sm:$0xf]
          %v2483 = vld [vmem:[#allocation10 + $0xdc] sm:$0xf]
          %v2484 = vld [vmem:[#allocation10 + $0xe0] sm:$0xf]
          %v2485 = vld [vmem:[#allocation10 + $0xe4] sm:$0xf]
          %v2486 = vld [vmem:[#allocation10 + $0xe8] sm:$0xf]
          %v2487 = vld [vmem:[#allocation10 + $0xec] sm:$0xf]
          %v2488 = vld [vmem:[#allocation10 + $0xf0] sm:$0xf]
          %v2489 = vld [vmem:[#allocation10 + $0xf4] sm:$0xf]
          %v2490 = vld [vmem:[#allocation10 + $0xf8] sm:$0xf]
          %v2491 = vld [vmem:[#allocation10 + $0xfc] sm:$0xf]
          %v2492 = vld [vmem:[#allocation10 + $0x100] sm:$0xf]
          %v2493 = vld [vmem:[#allocation10 + $0x104] sm:$0xf]
          %v2494 = vld [vmem:[#allocation10 + $0x108] sm:$0xf]
          %v2495 = vld [vmem:[#allocation10 + $0x10c] sm:$0xf]
          %v2496 = vld [vmem:[#allocation10 + $0x110] sm:$0xf]
          %v2497 = vld [vmem:[#allocation10 + $0x114] sm:$0xf]
          %v2498 = vld [vmem:[#allocation10 + $0x118] sm:$0xf]
          %v2499 = vld [vmem:[#allocation10 + $0x11c] sm:$0xf]
          %v2500 = vld [vmem:[#allocation10 + $0x120] sm:$0xf]
          %v2501 = vld [vmem:[#allocation10 + $0x124] sm:$0xf]
          %v2502 = vld [vmem:[#allocation10 + $0x128] sm:$0xf]
          %v2503 = vld [vmem:[#allocation10 + $0x12c] sm:$0xf]
          %v2504 = vld [vmem:[#allocation10 + $0x130] sm:$0xf]
          %v2505 = vld [vmem:[#allocation10 + $0x134] sm:$0xf]
          %v2506 = vld [vmem:[#allocation10 + $0x138] sm:$0xf]
          %v2507 = vld [vmem:[#allocation10 + $0x13c] sm:$0xf]
          %v2508 = vld [vmem:[#allocation10 + $0x140] sm:$0xf]
          %v2509 = vld [vmem:[#allocation10 + $0x144] sm:$0xf]
          %v2510 = vld [vmem:[#allocation10 + $0x148] sm:$0xf]
          %v2511 = vld [vmem:[#allocation10 + $0x14c] sm:$0xf]
          %v2512 = vld [vmem:[#allocation10 + $0x150] sm:$0xf]
          %v2513 = vld [vmem:[#allocation10 + $0x154] sm:$0xf]
          %v2514 = vld [vmem:[#allocation10 + $0x158] sm:$0xf]
          %v2515 = vld [vmem:[#allocation10 + $0x15c] sm:$0xf]
          %v2516 = vld [vmem:[#allocation10 + $0x160] sm:$0xf]
          %v2517 = vld [vmem:[#allocation10 + $0x164] sm:$0xf]
          %v2518 = vld [vmem:[#allocation10 + $0x168] sm:$0xf]
          %v2519 = vld [vmem:[#allocation10 + $0x16c] sm:$0xf]
          %v2520 = vld [vmem:[#allocation10 + $0x170] sm:$0xf]
          %v2521 = vld [vmem:[#allocation10 + $0x174] sm:$0xf]
          %v2522 = vld [vmem:[#allocation10 + $0x178] sm:$0xf]
          %v2523 = vld [vmem:[#allocation10 + $0x17c] sm:$0xf]
          %v2524 = vld [vmem:[#allocation10 + $0x180] sm:$0xf]
          %v2525 = vld [vmem:[#allocation10 + $0x184] sm:$0xf]
          %v2526 = vld [vmem:[#allocation10 + $0x188] sm:$0xf]
          %v2527 = vld [vmem:[#allocation10 + $0x18c] sm:$0xf]
          %v2528 = vld [vmem:[#allocation10 + $0x190] sm:$0xf]
          %v2529 = vld [vmem:[#allocation10 + $0x194] sm:$0xf]
          %v2530 = vld [vmem:[#allocation10 + $0x198] sm:$0xf]
          %v2531 = vld [vmem:[#allocation10 + $0x19c] sm:$0xf]
          %v2532 = vld [vmem:[#allocation10 + $0x1a0] sm:$0xf]
          %v2533 = vld [vmem:[#allocation10 + $0x1a4] sm:$0xf]
          %v2534 = vld [vmem:[#allocation10 + $0x1a8] sm:$0xf]
          %v2535 = vld [vmem:[#allocation10 + $0x1ac] sm:$0xf]
          %v2536 = vld [vmem:[#allocation10 + $0x1b0] sm:$0xf]
          %v2537 = vld [vmem:[#allocation10 + $0x1b4] sm:$0xf]
          %v2538 = vld [vmem:[#allocation10 + $0x1b8] sm:$0xf]
          %v2539 = vld [vmem:[#allocation10 + $0x1bc] sm:$0xf]
          %v2540 = vld [vmem:[#allocation10 + $0x1c0] sm:$0xf]
          %v2541 = vld [vmem:[#allocation10 + $0x1c4] sm:$0xf]
          %v2542 = vld [vmem:[#allocation10 + $0x1c8] sm:$0xf]
          %v2543 = vld [vmem:[#allocation10 + $0x1cc] sm:$0xf]
          %v2544 = vld [vmem:[#allocation10 + $0x1d0] sm:$0xf]
          %v2545 = vld [vmem:[#allocation10 + $0x1d4] sm:$0xf]
          %v2546 = vld [vmem:[#allocation10 + $0x1d8] sm:$0xf]
          %v2547 = vld [vmem:[#allocation10 + $0x1dc] sm:$0xf]
          %v2548 = vld [vmem:[#allocation10 + $0x1e0] sm:$0xf]
          %v2549 = vld [vmem:[#allocation10 + $0x1e4] sm:$0xf]
          %v2550 = vld [vmem:[#allocation10 + $0x1e8] sm:$0xf]
          %v2551 = vld [vmem:[#allocation10 + $0x1ec] sm:$0xf]
          %v2552 = vld [vmem:[#allocation10 + $0x1f0] sm:$0xf]
          %v2553 = vld [vmem:[#allocation10 + $0x1f4] sm:$0xf]
          %v2554 = vld [vmem:[#allocation10 + $0x1f8] sm:$0xf]
          %v2555 = vld [vmem:[#allocation10 + $0x1fc] sm:$0xf]
          %v2556 = vld [vmem:[#allocation12] sm:$0x1]
          %v2558 = vlaneseq
          %v2559 = vshrl.u32 %v2558, 7
          %v2560 = vsub.s32 0, %v2559
          %v2561 = vrot.slane %v2556, %v2560
          %v2691 = vunpack.c.l.b16 %v2428
          %v2692 = vunpack.c.l.b16 %v2429
          %v2693 = vunpack.c.l.b16 %v2430
          %v2694 = vunpack.c.l.b16 %v2431
          %v2695 = vunpack.c.l.b16 %v2432
          %v2696 = vunpack.c.l.b16 %v2433
          %v2697 = vunpack.c.l.b16 %v2434
          %v2698 = vunpack.c.l.b16 %v2435
          %v2699 = vunpack.c.l.b16 %v2436
          %v2700 = vunpack.c.l.b16 %v2437
          %v2701 = vunpack.c.l.b16 %v2438
          %v2702 = vunpack.c.l.b16 %v2439
          %v2703 = vunpack.c.l.b16 %v2440
          %v2704 = vunpack.c.l.b16 %v2441
          %v2705 = vunpack.c.l.b16 %v2442
          %v2706 = vunpack.c.l.b16 %v2443
          %v2707 = vunpack.c.l.b16 %v2444
          %v2708 = vunpack.c.l.b16 %v2445
          %v2709 = vunpack.c.l.b16 %v2446
          %v2710 = vunpack.c.l.b16 %v2447
          %v2711 = vunpack.c.l.b16 %v2448
          %v2712 = vunpack.c.l.b16 %v2449
          %v2713 = vunpack.c.l.b16 %v2450
          %v2714 = vunpack.c.l.b16 %v2451
          %v2715 = vunpack.c.l.b16 %v2452
          %v2716 = vunpack.c.l.b16 %v2453
          %v2717 = vunpack.c.l.b16 %v2454
          %v2718 = vunpack.c.l.b16 %v2455
          %v2719 = vunpack.c.l.b16 %v2456
          %v2720 = vunpack.c.l.b16 %v2457
          %v2721 = vunpack.c.l.b16 %v2458
          %v2722 = vunpack.c.l.b16 %v2459
          %v2723 = vunpack.c.l.b16 %v2460
          %v2724 = vunpack.c.l.b16 %v2461
          %v2725 = vunpack.c.l.b16 %v2462
          %v2726 = vunpack.c.l.b16 %v2463
          %v2727 = vunpack.c.l.b16 %v2464
          %v2728 = vunpack.c.l.b16 %v2465
          %v2729 = vunpack.c.l.b16 %v2466
          %v2730 = vunpack.c.l.b16 %v2467
          %v2731 = vunpack.c.l.b16 %v2468
          %v2732 = vunpack.c.l.b16 %v2469
          %v2733 = vunpack.c.l.b16 %v2470
          %v2734 = vunpack.c.l.b16 %v2471
          %v2735 = vunpack.c.l.b16 %v2472
          %v2736 = vunpack.c.l.b16 %v2473
          %v2737 = vunpack.c.l.b16 %v2474
          %v2738 = vunpack.c.l.b16 %v2475
          %v2739 = vunpack.c.l.b16 %v2476
          %v2740 = vunpack.c.l.b16 %v2477
          %v2741 = vunpack.c.l.b16 %v2478
          %v2742 = vunpack.c.l.b16 %v2479
          %v2743 = vunpack.c.l.b16 %v2480
          %v2744 = vunpack.c.l.b16 %v2481
          %v2745 = vunpack.c.l.b16 %v2482
          %v2746 = vunpack.c.l.b16 %v2483
          %v2747 = vunpack.c.l.b16 %v2484
          %v2748 = vunpack.c.l.b16 %v2485
          %v2749 = vunpack.c.l.b16 %v2486
          %v2750 = vunpack.c.l.b16 %v2487
          %v2751 = vunpack.c.l.b16 %v2488
          %v2752 = vunpack.c.l.b16 %v2489
          %v2753 = vunpack.c.l.b16 %v2490
          %v2754 = vunpack.c.l.b16 %v2491
          %v2755 = vunpack.c.l.b16 %v2492
          %v2756 = vunpack.c.l.b16 %v2493
          %v2757 = vunpack.c.l.b16 %v2494
          %v2758 = vunpack.c.l.b16 %v2495
          %v2759 = vunpack.c.l.b16 %v2496
          %v2760 = vunpack.c.l.b16 %v2497
          %v2761 = vunpack.c.l.b16 %v2498
          %v2762 = vunpack.c.l.b16 %v2499
          %v2763 = vunpack.c.l.b16 %v2500
          %v2764 = vunpack.c.l.b16 %v2501
          %v2765 = vunpack.c.l.b16 %v2502
          %v2766 = vunpack.c.l.b16 %v2503
          %v2767 = vunpack.c.l.b16 %v2504
          %v2768 = vunpack.c.l.b16 %v2505
          %v2769 = vunpack.c.l.b16 %v2506
          %v2770 = vunpack.c.l.b16 %v2507
          %v2771 = vunpack.c.l.b16 %v2508
          %v2772 = vunpack.c.l.b16 %v2509
          %v2773 = vunpack.c.l.b16 %v2510
          %v2774 = vunpack.c.l.b16 %v2511
          %v2775 = vunpack.c.l.b16 %v2512
          %v2776 = vunpack.c.l.b16 %v2513
          %v2777 = vunpack.c.l.b16 %v2514
          %v2778 = vunpack.c.l.b16 %v2515
          %v2779 = vunpack.c.l.b16 %v2516
          %v2780 = vunpack.c.l.b16 %v2517
          %v2781 = vunpack.c.l.b16 %v2518
          %v2782 = vunpack.c.l.b16 %v2519
          %v2783 = vunpack.c.l.b16 %v2520
          %v2784 = vunpack.c.l.b16 %v2521
          %v2785 = vunpack.c.l.b16 %v2522
          %v2786 = vunpack.c.l.b16 %v2523
          %v2787 = vunpack.c.l.b16 %v2524
          %v2788 = vunpack.c.l.b16 %v2525
          %v2789 = vunpack.c.l.b16 %v2526
          %v2790 = vunpack.c.l.b16 %v2527
          %v2791 = vunpack.c.l.b16 %v2528
          %v2792 = vunpack.c.l.b16 %v2529
          %v2793 = vunpack.c.l.b16 %v2530
          %v2794 = vunpack.c.l.b16 %v2531
          %v2795 = vunpack.c.l.b16 %v2532
          %v2796 = vunpack.c.l.b16 %v2533
          %v2797 = vunpack.c.l.b16 %v2534
          %v2798 = vunpack.c.l.b16 %v2535
          %v2799 = vunpack.c.l.b16 %v2536
          %v2800 = vunpack.c.l.b16 %v2537
          %v2801 = vunpack.c.l.b16 %v2538
          %v2802 = vunpack.c.l.b16 %v2539
          %v2803 = vunpack.c.l.b16 %v2540
          %v2804 = vunpack.c.l.b16 %v2541
          %v2805 = vunpack.c.l.b16 %v2542
          %v2806 = vunpack.c.l.b16 %v2543
          %v2807 = vunpack.c.l.b16 %v2544
          %v2808 = vunpack.c.l.b16 %v2545
          %v2809 = vunpack.c.l.b16 %v2546
          %v2810 = vunpack.c.l.b16 %v2547
          %v2811 = vunpack.c.l.b16 %v2548
          %v2812 = vunpack.c.l.b16 %v2549
          %v2813 = vunpack.c.l.b16 %v2550
          %v2814 = vunpack.c.l.b16 %v2551
          %v2815 = vunpack.c.l.b16 %v2552
          %v2816 = vunpack.c.l.b16 %v2553
          %v2817 = vunpack.c.l.b16 %v2554
          %v2818 = vunpack.c.l.b16 %v2555
          %v2819 = vpack.c.b16 %v2692, %v2691
          %v2820 = vpack.c.b16 %v2694, %v2693
          %v2821 = vpack.c.b16 %v2696, %v2695
          %v2822 = vpack.c.b16 %v2698, %v2697
          %v2823 = vpack.c.b16 %v2700, %v2699
          %v2824 = vpack.c.b16 %v2702, %v2701
          %v2825 = vpack.c.b16 %v2704, %v2703
          %v2826 = vpack.c.b16 %v2706, %v2705
          %v2827 = vpack.c.b16 %v2708, %v2707
          %v2828 = vpack.c.b16 %v2710, %v2709
          %v2829 = vpack.c.b16 %v2712, %v2711
          %v2830 = vpack.c.b16 %v2714, %v2713
          %v2831 = vpack.c.b16 %v2716, %v2715
          %v2832 = vpack.c.b16 %v2718, %v2717
          %v2833 = vpack.c.b16 %v2720, %v2719
          %v2834 = vpack.c.b16 %v2722, %v2721
          %v2835 = vpack.c.b16 %v2724, %v2723
          %v2836 = vpack.c.b16 %v2726, %v2725
          %v2837 = vpack.c.b16 %v2728, %v2727
          %v2838 = vpack.c.b16 %v2730, %v2729
          %v2839 = vpack.c.b16 %v2732, %v2731
          %v2840 = vpack.c.b16 %v2734, %v2733
          %v2841 = vpack.c.b16 %v2736, %v2735
          %v2842 = vpack.c.b16 %v2738, %v2737
          %v2843 = vpack.c.b16 %v2740, %v2739
          %v2844 = vpack.c.b16 %v2742, %v2741
          %v2845 = vpack.c.b16 %v2744, %v2743
          %v2846 = vpack.c.b16 %v2746, %v2745
          %v2847 = vpack.c.b16 %v2748, %v2747
          %v2848 = vpack.c.b16 %v2750, %v2749
          %v2849 = vpack.c.b16 %v2752, %v2751
          %v2850 = vpack.c.b16 %v2754, %v2753
          %v2851 = vpack.c.b16 %v2756, %v2755
          %v2852 = vpack.c.b16 %v2758, %v2757
          %v2853 = vpack.c.b16 %v2760, %v2759
          %v2854 = vpack.c.b16 %v2762, %v2761
          %v2855 = vpack.c.b16 %v2764, %v2763
          %v2856 = vpack.c.b16 %v2766, %v2765
          %v2857 = vpack.c.b16 %v2768, %v2767
          %v2858 = vpack.c.b16 %v2770, %v2769
          %v2859 = vpack.c.b16 %v2772, %v2771
          %v2860 = vpack.c.b16 %v2774, %v2773
          %v2861 = vpack.c.b16 %v2776, %v2775
          %v2862 = vpack.c.b16 %v2778, %v2777
          %v2863 = vpack.c.b16 %v2780, %v2779
          %v2864 = vpack.c.b16 %v2782, %v2781
          %v2865 = vpack.c.b16 %v2784, %v2783
          %v2866 = vpack.c.b16 %v2786, %v2785
          %v2867 = vpack.c.b16 %v2788, %v2787
          %v2868 = vpack.c.b16 %v2790, %v2789
          %v2869 = vpack.c.b16 %v2792, %v2791
          %v2870 = vpack.c.b16 %v2794, %v2793
          %v2871 = vpack.c.b16 %v2796, %v2795
          %v2872 = vpack.c.b16 %v2798, %v2797
          %v2873 = vpack.c.b16 %v2800, %v2799
          %v2874 = vpack.c.b16 %v2802, %v2801
          %v2875 = vpack.c.b16 %v2804, %v2803
          %v2876 = vpack.c.b16 %v2806, %v2805
          %v2877 = vpack.c.b16 %v2808, %v2807
          %v2878 = vpack.c.b16 %v2810, %v2809
          %v2879 = vpack.c.b16 %v2812, %v2811
          %v2880 = vpack.c.b16 %v2814, %v2813
          %v2881 = vpack.c.b16 %v2816, %v2815
          %v2882 = vpack.c.b16 %v2818, %v2817
          %2947 = vmatprep.subr.bf16.mxu0 0
          %2948 = vmatpush1.bf16.msra.mxu0 %v2819
          %2949 = vmatprep.subr.bf16.mxu0 0
          %2950 = vmatpush1.bf16.msra.mxu0 %v2820
          %2951 = vmatprep.subr.bf16.mxu0 0
          %2952 = vmatpush1.bf16.msra.mxu0 %v2821
          %2953 = vmatprep.subr.bf16.mxu0 0
          %2954 = vmatpush1.bf16.msra.mxu0 %v2822
          %2955 = vmatprep.subr.bf16.mxu0 0
          %2956 = vmatpush1.bf16.msra.mxu0 %v2823
          %2957 = vmatprep.subr.bf16.mxu0 0
          %2958 = vmatpush1.bf16.msra.mxu0 %v2824
          %2959 = vmatprep.subr.bf16.mxu0 0
          %2960 = vmatpush1.bf16.msra.mxu0 %v2825
          %2961 = vmatprep.subr.bf16.mxu0 0
          %2962 = vmatpush1.bf16.msra.mxu0 %v2826
          %2963 = vmatprep.subr.bf16.mxu0 0
          %2964 = vmatpush1.bf16.msra.mxu0 %v2827
          %2965 = vmatprep.subr.bf16.mxu0 0
          %2966 = vmatpush1.bf16.msra.mxu0 %v2828
          %2967 = vmatprep.subr.bf16.mxu0 0
          %2968 = vmatpush1.bf16.msra.mxu0 %v2829
          %2969 = vmatprep.subr.bf16.mxu0 0
          %2970 = vmatpush1.bf16.msra.mxu0 %v2830
          %2971 = vmatprep.subr.bf16.mxu0 0
          %2972 = vmatpush1.bf16.msra.mxu0 %v2831
          %2973 = vmatprep.subr.bf16.mxu0 0
          %2974 = vmatpush1.bf16.msra.mxu0 %v2832
          %2975 = vmatprep.subr.bf16.mxu0 0
          %2976 = vmatpush1.bf16.msra.mxu0 %v2833
          %2977 = vmatprep.subr.bf16.mxu0 0
          %2978 = vmatpush1.bf16.msra.mxu0 %v2834
          %2979 = vmatprep.mubr.bf16.mxu0 %v2421
          %2980 = vmatmul.mubr.bf16.gmra.mrb[0].mxu0 %v2420
          %v2981 = vpop.f32.mrb[0].mxu0
          %v2982 = vadd.f32 %v2561, %v2981
          %v2983 = vpop.f32.mrb[0].mxu0
          %v2984 = vpop.f32.mrb[0].mxu0
          %v2985 = vpop.f32.mrb[0].mxu0
          %2986 = vdwg.mxu0
          %2987 = vmatprep.subr.bf16.mxu0 0
          %2988 = vmatpush1.bf16.msra.mxu0 %v2835
          %2989 = vmatprep.subr.bf16.mxu0 0
          %2990 = vmatpush1.bf16.msra.mxu0 %v2836
          %2991 = vmatprep.subr.bf16.mxu0 0
          %2992 = vmatpush1.bf16.msra.mxu0 %v2837
          %2993 = vmatprep.subr.bf16.mxu0 0
          %2994 = vmatpush1.bf16.msra.mxu0 %v2838
          %2995 = vmatprep.subr.bf16.mxu0 0
          %2996 = vmatpush1.bf16.msra.mxu0 %v2839
          %2997 = vmatprep.subr.bf16.mxu0 0
          %2998 = vmatpush1.bf16.msra.mxu0 %v2840
          %2999 = vmatprep.subr.bf16.mxu0 0
          %3000 = vmatpush1.bf16.msra.mxu0 %v2841
          %3001 = vmatprep.subr.bf16.mxu0 0
          %3002 = vmatpush1.bf16.msra.mxu0 %v2842
          %3003 = vmatprep.subr.bf16.mxu0 0
          %3004 = vmatpush1.bf16.msra.mxu0 %v2843
          %3005 = vmatprep.subr.bf16.mxu0 0
          %3006 = vmatpush1.bf16.msra.mxu0 %v2844
          %3007 = vmatprep.subr.bf16.mxu0 0
          %3008 = vmatpush1.bf16.msra.mxu0 %v2845
          %3009 = vmatprep.subr.bf16.mxu0 0
          %3010 = vmatpush1.bf16.msra.mxu0 %v2846
          %3011 = vmatprep.subr.bf16.mxu0 0
          %3012 = vmatpush1.bf16.msra.mxu0 %v2847
          %3013 = vmatprep.subr.bf16.mxu0 0
          %3014 = vmatpush1.bf16.msra.mxu0 %v2848
          %3015 = vmatprep.subr.bf16.mxu0 0
          %3016 = vmatpush1.bf16.msra.mxu0 %v2849
          %3017 = vmatprep.subr.bf16.mxu0 0
          %3018 = vmatpush1.bf16.msra.mxu0 %v2850
          %3019 = vmatprep.mubr.bf16.mxu0 %v2423
          %3020 = vmatmul.mubr.bf16.gmra.mrb[0].mxu0 %v2422
          %v3021 = vpop.f32.mrb[0].mxu0
          %v3022 = vadd.f32 %v2982, %v3021
          %v3023 = vpop.f32.mrb[0].mxu0
          %v3024 = vpop.f32.mrb[0].mxu0
          %v3025 = vpop.f32.mrb[0].mxu0
          %3026 = vdwg.mxu0
          %3027 = vmatprep.subr.bf16.mxu0 0
          %3028 = vmatpush1.bf16.msra.mxu0 %v2851
          %3029 = vmatprep.subr.bf16.mxu0 0
          %3030 = vmatpush1.bf16.msra.mxu0 %v2852
          %3031 = vmatprep.subr.bf16.mxu0 0
          %3032 = vmatpush1.bf16.msra.mxu0 %v2853
          %3033 = vmatprep.subr.bf16.mxu0 0
          %3034 = vmatpush1.bf16.msra.mxu0 %v2854
          %3035 = vmatprep.subr.bf16.mxu0 0
          %3036 = vmatpush1.bf16.msra.mxu0 %v2855
          %3037 = vmatprep.subr.bf16.mxu0 0
          %3038 = vmatpush1.bf16.msra.mxu0 %v2856
          %3039 = vmatprep.subr.bf16.mxu0 0
          %3040 = vmatpush1.bf16.msra.mxu0 %v2857
          %3041 = vmatprep.subr.bf16.mxu0 0
          %3042 = vmatpush1.bf16.msra.mxu0 %v2858
          %3043 = vmatprep.subr.bf16.mxu0 0
          %3044 = vmatpush1.bf16.msra.mxu0 %v2859
          %3045 = vmatprep.subr.bf16.mxu0 0
          %3046 = vmatpush1.bf16.msra.mxu0 %v2860
          %3047 = vmatprep.subr.bf16.mxu0 0
          %3048 = vmatpush1.bf16.msra.mxu0 %v2861
          %3049 = vmatprep.subr.bf16.mxu0 0
          %3050 = vmatpush1.bf16.msra.mxu0 %v2862
          %3051 = vmatprep.subr.bf16.mxu0 0
          %3052 = vmatpush1.bf16.msra.mxu0 %v2863
          %3053 = vmatprep.subr.bf16.mxu0 0
          %3054 = vmatpush1.bf16.msra.mxu0 %v2864
          %3055 = vmatprep.subr.bf16.mxu0 0
          %3056 = vmatpush1.bf16.msra.mxu0 %v2865
          %3057 = vmatprep.subr.bf16.mxu0 0
          %3058 = vmatpush1.bf16.msra.mxu0 %v2866
          %3059 = vmatprep.mubr.bf16.mxu0 %v2425
          %3060 = vmatmul.mubr.bf16.gmra.mrb[0].mxu0 %v2424
          %v3061 = vpop.f32.mrb[0].mxu0
          %v3062 = vadd.f32 %v3022, %v3061
          %v3063 = vpop.f32.mrb[0].mxu0
          %v3064 = vpop.f32.mrb[0].mxu0
          %v3065 = vpop.f32.mrb[0].mxu0
          %3066 = vdwg.mxu0
          %3067 = vmatprep.subr.bf16.mxu0 0
          %3068 = vmatpush1.bf16.msra.mxu0 %v2867
          %3069 = vmatprep.subr.bf16.mxu0 0
          %3070 = vmatpush1.bf16.msra.mxu0 %v2868
          %3071 = vmatprep.subr.bf16.mxu0 0
          %3072 = vmatpush1.bf16.msra.mxu0 %v2869
          %3073 = vmatprep.subr.bf16.mxu0 0
          %3074 = vmatpush1.bf16.msra.mxu0 %v2870
          %3075 = vmatprep.subr.bf16.mxu0 0
          %3076 = vmatpush1.bf16.msra.mxu0 %v2871
          %3077 = vmatprep.subr.bf16.mxu0 0
          %3078 = vmatpush1.bf16.msra.mxu0 %v2872
          %3079 = vmatprep.subr.bf16.mxu0 0
          %3080 = vmatpush1.bf16.msra.mxu0 %v2873
          %3081 = vmatprep.subr.bf16.mxu0 0
          %3082 = vmatpush1.bf16.msra.mxu0 %v2874
          %3083 = vmatprep.subr.bf16.mxu0 0
          %3084 = vmatpush1.bf16.msra.mxu0 %v2875
          %3085 = vmatprep.subr.bf16.mxu0 0
          %3086 = vmatpush1.bf16.msra.mxu0 %v2876
          %3087 = vmatprep.subr.bf16.mxu0 0
          %3088 = vmatpush1.bf16.msra.mxu0 %v2877
          %3089 = vmatprep.subr.bf16.mxu0 0
          %3090 = vmatpush1.bf16.msra.mxu0 %v2878
          %3091 = vmatprep.subr.bf16.mxu0 0
          %3092 = vmatpush1.bf16.msra.mxu0 %v2879
          %3093 = vmatprep.subr.bf16.mxu0 0
          %3094 = vmatpush1.bf16.msra.mxu0 %v2880
          %3095 = vmatprep.subr.bf16.mxu0 0
          %3096 = vmatpush1.bf16.msra.mxu0 %v2881
          %3097 = vmatprep.subr.bf16.mxu0 0
          %3098 = vmatpush1.bf16.msra.mxu0 %v2882
          %3099 = vmatprep.mubr.bf16.mxu0 %v2427
          %3100 = vmatmul.mubr.bf16.gmra.mrb[0].mxu0 %v2426
          %v3101 = vpop.f32.mrb[0].mxu0
          %v3102 = vadd.f32 %v3062, %v3101
          %v3103 = vpop.f32.mrb[0].mxu0
          %v3104 = vpop.f32.mrb[0].mxu0
          %v3105 = vpop.f32.mrb[0].mxu0
          %3106 = vdwg.mxu0
          %v3107 = vmax.f32 %v3102, 0.0
          %v3108 = vpack.c.bf16 %v3107, %v3107
          %v3109 = vld [vmem:[#allocation13] sm:$0xf]
          %v3110 = vld [vmem:[#allocation13 + $0x4] sm:$0xf]
          %v3111 = vld [vmem:[#allocation13 + $0x8] sm:$0xf]
          %v3112 = vld [vmem:[#allocation13 + $0xc] sm:$0xf]
          %v3113 = vld [vmem:[#allocation13 + $0x10] sm:$0xf]
          %v3114 = vld [vmem:[#allocation13 + $0x14] sm:$0xf]
          %v3115 = vld [vmem:[#allocation13 + $0x18] sm:$0xf]
          %v3116 = vld [vmem:[#allocation13 + $0x1c] sm:$0xf]
          %v3117 = vld [vmem:[#allocation13 + $0x20] sm:$0xf]
          %v3118 = vld [vmem:[#allocation13 + $0x24] sm:$0xf]
          %v3119 = vld [vmem:[#allocation13 + $0x28] sm:$0xf]
          %v3120 = vld [vmem:[#allocation13 + $0x2c] sm:$0xf]
          %v3121 = vld [vmem:[#allocation13 + $0x30] sm:$0xf]
          %v3122 = vld [vmem:[#allocation13 + $0x34] sm:$0xf]
          %v3123 = vld [vmem:[#allocation13 + $0x38] sm:$0xf]
          %v3124 = vld [vmem:[#allocation13 + $0x3c] sm:$0xf]
          %v3125 = vld [vmem:[#allocation15] sm:$0x1]
          %v3127 = vlaneseq
          %v3128 = vshrl.u32 %v3127, 7
          %v3129 = vsub.s32 0, %v3128
          %v3130 = vrot.slane %v3125, %v3129
          %v3148 = vunpack.c.l.b16 %v3109
          %v3149 = vunpack.c.l.b16 %v3110
          %v3150 = vunpack.c.l.b16 %v3111
          %v3151 = vunpack.c.l.b16 %v3112
          %v3152 = vunpack.c.l.b16 %v3113
          %v3153 = vunpack.c.l.b16 %v3114
          %v3154 = vunpack.c.l.b16 %v3115
          %v3155 = vunpack.c.l.b16 %v3116
          %v3156 = vunpack.c.l.b16 %v3117
          %v3157 = vunpack.c.l.b16 %v3118
          %v3158 = vunpack.c.l.b16 %v3119
          %v3159 = vunpack.c.l.b16 %v3120
          %v3160 = vunpack.c.l.b16 %v3121
          %v3161 = vunpack.c.l.b16 %v3122
          %v3162 = vunpack.c.l.b16 %v3123
          %v3163 = vunpack.c.l.b16 %v3124
          %v3164 = vpack.c.b16 %v3149, %v3148
          %v3165 = vpack.c.b16 %v3151, %v3150
          %v3166 = vpack.c.b16 %v3153, %v3152
          %v3167 = vpack.c.b16 %v3155, %v3154
          %v3168 = vpack.c.b16 %v3157, %v3156
          %v3169 = vpack.c.b16 %v3159, %v3158
          %v3170 = vpack.c.b16 %v3161, %v3160
          %v3171 = vpack.c.b16 %v3163, %v3162
          %3180 = vmatprep.subr.bf16.mxu0 0
          %3181 = vmatpush1.bf16.msra.mxu0 %v3164
          %3182 = vmatprep.subr.bf16.mxu0 0
          %3183 = vmatpush1.bf16.msra.mxu0 %v3165
          %3184 = vmatprep.subr.bf16.mxu0 0
          %3185 = vmatpush1.bf16.msra.mxu0 %v3166
          %3186 = vmatprep.subr.bf16.mxu0 0
          %3187 = vmatpush1.bf16.msra.mxu0 %v3167
          %3188 = vmatprep.subr.bf16.mxu0 0
          %3189 = vmatpush1.bf16.msra.mxu0 %v3168
          %3190 = vmatprep.subr.bf16.mxu0 0
          %3191 = vmatpush1.bf16.msra.mxu0 %v3169
          %3192 = vmatprep.subr.bf16.mxu0 0
          %3193 = vmatpush1.bf16.msra.mxu0 %v3170
          %3194 = vmatprep.subr.bf16.mxu0 0
          %3195 = vmatpush1.bf16.msra.mxu0 %v3171
          %3196 = vmatprep.subr.bf16.mxu0 0
          %3197 = vmatpush1.bf16.msra.mxu0 0
          %3198 = vmatprep.subr.bf16.mxu0 0
          %3199 = vmatpush1.bf16.msra.mxu0 0
          %3200 = vmatprep.subr.bf16.mxu0 0
          %3201 = vmatpush1.bf16.msra.mxu0 0
          %3202 = vmatprep.subr.bf16.mxu0 0
          %3203 = vmatpush1.bf16.msra.mxu0 0
          %3204 = vmatprep.subr.bf16.mxu0 0
          %3205 = vmatpush1.bf16.msra.mxu0 0
          %3206 = vmatprep.subr.bf16.mxu0 0
          %3207 = vmatpush1.bf16.msra.mxu0 0
          %3208 = vmatprep.subr.bf16.mxu0 0
          %3209 = vmatpush1.bf16.msra.mxu0 0
          %3210 = vmatprep.subr.bf16.mxu0 0
          %3211 = vmatpush1.bf16.msra.mxu0 0
          %3212 = vmatprep.mubr.bf16.mxu0 0
          %3213 = vmatmul.mubr.bf16.gmra.mrb[0].mxu0 %v3108
          %v3214 = vpop.f32.mrb[0].mxu0
          %v3215 = vadd.f32 %v3130, %v3214
          %v3216 = vpop.f32.mrb[0].mxu0
          %v3217 = vpop.f32.mrb[0].mxu0
          %v3218 = vpop.f32.mrb[0].mxu0
          %3219 = vdwg.mxu0
          %3220 = vst [vmem:[#allocation16] sm:$0xff] %v3215
        $region88: #{tpu_custom_call.1} parent=51 // pred_fallthru
          _
        // Predicated region
        $region89: #{tpu_custom_call.1} parent=51 // pred_check
          %p3221 = pneg %p239
        $region90: #{tpu_custom_call.1} parent=51 // pred_check_branch
          %3223 = sbr.rel (%p3221) target = $region92
        $region91: #{tpu_custom_call.1} parent=51 // pred_region
          %s3225 = ssub.s32 128, 128
          %3226 = vsyncadd [#allocation6], %s3225
          %s3227 = smul.addr %s33, 128
          %s3228 = scalar_lea.hbm %s8, %s3227
          %s3230 = sshll.u32 [#allocation16], 4
          %s3231 = int_to_ptr.vmem [resolvable:$true] %s3230
          %3233 = dma.vmem_to_hbm [thread:$0]  %s3231, 128, %s3228, [#allocation6]
        $region92: #{tpu_custom_call.1} parent=51 // pred_fallthru
          _
        // Predicated region
        $region93: #{tpu_custom_call.1} parent=51 // pred_check
          %p3234 = pneg %p239
        $region94: #{tpu_custom_call.1} parent=51 // pred_check_branch
          %3236 = sbr.rel (%p3234) target = $region96
        $region95: #{tpu_custom_call.1} parent=51 // pred_region
          %3237 = dma.done [#allocation6], 128
        $region96: #{tpu_custom_call.1} parent=51 // pred_fallthru
          _
      $region52: #{tpu_custom_call.1} parent=5 // pred_fallthru
        _
      %p3238 = scmp.le.s32.totalorder 2, %s24
      // Predicated region
      $region97: #{tpu_custom_call.1} parent=5 // pred_check
        %p3239 = pneg %p3238
      $region98: #{tpu_custom_call.1} parent=5 // pred_check_branch
        %3241 = sbr.rel (%p3239) target = $region100
      $region99: #{tpu_custom_call.1} parent=5 // pred_region
        %s3242 = ssub.s32 %s24, 2
      $region100: #{tpu_custom_call.1} parent=5 // pred_fallthru
        _
    $region6: #{tpu_custom_call.1} parent=1 // loop_footer
      %s28 = sadd.s32 1, %s24
    $region7: #{tpu_custom_call.1} parent=1 // loop_footer_branch
      %23 = sbr.rel target = $region3
    $region8: #{tpu_custom_call.1} parent=1 // loop_exit
      _
    %3243 = vsyncpa [#allocation5], 1
    %s3244 = scalar_lea.sflag [#allocation5], 1
    %3245 = vsyncpa %s3244, 1
    %3246 = vsyncpa [#allocation8], 1
    %s3247 = scalar_lea.sflag [#allocation8], 1
    %3248 = vsyncpa %s3247, 1
    %3249 = vsyncpa [#allocation11], 1
    %3250 = vsyncpa [#allocation14], 1
    %3251 = vsyncpa [#allocation6], 1
    %s3252 = scalar_lea.sflag [#allocation6], 1
    %3253 = vsyncpa %s3252, 1

</llo_original>
